<compile_context>
chip_gen: v7x
topology: tpu7x:2x2x1
jax: 0.10.0
libtpu: 0.0.40
codegen_flags: <defaults>
</compile_context>

<pallas_src>
import functools

import jax
import jax.numpy as jnp
from jax import lax
from jax.experimental import pallas as pl
from jax.experimental.pallas import tpu as pltpu


def _logsigmoid(x):
    # numerically stable log(sigmoid(x)) = min(x, 0) - log1p(exp(-|x|))
    return jnp.minimum(x, 0.0) - jnp.log1p(jnp.exp(-jnp.abs(x)))


def _sgns_kernel(B, TB, K, E, tiles_per_split,
                 c_ids, p_ids, n_ids,          # SMEM scalar-prefetch refs
                 emb_v_ref, emb_u_ref,         # VMEM-resident embedding tables
                 out_ref,                      # (1,1,1) per-split partial sum
                 cen_buf, ctx_buf, acc_ref):   # VMEM scratch
    s = pl.program_id(0)                       # split (parallel across cores)
    t = pl.program_id(1)                       # batch tile within split
    base = (s * tiles_per_split + t) * TB

    @pl.when(t == 0)
    def _():
        acc_ref[...] = jnp.zeros_like(acc_ref)

    # ---- fused gather: in-VMEM dynamic row reads (no per-row DMAs) --------
    # ctx_buf layout is k-major: row j*TB + r, j==0 -> positive context,
    # j>=1 -> negative sample j-1 of batch row r.
    @pl.loop(0, TB)
    def _gather(r):
        cid = c_ids[base + r]
        pid = p_ids[base + r]
        cen_buf[pl.ds(r, 1), :] = emb_v_ref[pl.ds(cid, 1), :]
        ctx_buf[pl.ds(r, 1), :] = emb_u_ref[pl.ds(pid, 1), :]
        for k in range(K):                     # K is small & static -> unrolled
            nid = n_ids[(base + r) * K + k]
            ctx_buf[pl.ds((k + 1) * TB + r, 1), :] = emb_u_ref[pl.ds(nid, 1), :]

    # ---- lane-dense compute: one multiply + lane reduce per (K+1) group ----
    cen = cen_buf[...].astype(jnp.float32)                          # (TB, E)
    pos = ctx_buf[pl.ds(0, TB), :].astype(jnp.float32)
    score = _logsigmoid(jnp.sum(pos * cen, axis=-1, keepdims=True))  # (TB, 1)
    for k in range(K):
        neg = ctx_buf[pl.ds((k + 1) * TB, TB), :].astype(jnp.float32)
        score = score + _logsigmoid(-jnp.sum(neg * cen, axis=-1, keepdims=True))

    # mask batch-padding rows (last tiles of a split / padded splits)
    nvalid = jnp.clip(B - base, 0, TB)
    row_idx = lax.broadcasted_iota(jnp.int32, (TB, 1), 0)
    score = jnp.where(row_idx < nvalid, score, 0.0)
    acc_ref[...] = acc_ref[...] + jnp.sum(score, keepdims=True)

    @pl.when(t == pl.num_programs(1) - 1)
    def _():
        out_ref[...] = (-acc_ref[...]).reshape(1, 1, 1)


def _sgns_loss_chunk(center, pos, neg, emb_v, emb_u, *, tile_b, num_splits):
    """Loss over one chunk of the batch (indices kept small enough for SMEM)."""
    B = center.shape[0]
    K = neg.shape[1]
    V, E = emb_v.shape

    TB = max(1, min(int(tile_b), B))
    num_tiles = pl.cdiv(B, TB)
    splits = max(1, min(int(num_splits), num_tiles))
    tiles_per_split = pl.cdiv(num_tiles, splits)
    B_pad = splits * tiles_per_split * TB

    # Pad index arrays; padded rows gather table row 0 and are masked in-kernel.
    c_ids = jnp.pad(center.astype(jnp.int32), (0, B_pad - B))
    p_ids = jnp.pad(pos.astype(jnp.int32), (0, B_pad - B))
    n_ids = jnp.pad(neg.astype(jnp.int32).reshape(-1), (0, (B_pad - B) * K))

    itemsize = jnp.dtype(emb_v.dtype).itemsize
    # 2 tables x 2 pipeline buffers (resident, but budgeted) + gather scratch.
    table_bytes = 2 * 2 * V * E * itemsize
    scratch_bytes = (K + 2) * TB * E * itemsize + 4096
    vmem_needed = table_bytes + scratch_bytes + (1 << 20)
    assert vmem_needed <= 100 * (1 << 20), (
        "embedding tables too large to stage in VMEM"
        "  # TODO(synk): V-blocked staging / pl.Element row-gather fallback")
    vmem_limit = int(min(max(vmem_needed, 32 * (1 << 20)), 100 * (1 << 20)))

    kernel = functools.partial(_sgns_kernel, B, TB, K, E, tiles_per_split)
    cost = pl.CostEstimate(
        flops=2 * B * (K + 1) * E,
        transcendentals=2 * B * (K + 1),
        bytes_accessed=2 * V * E * itemsize + B * (K + 2) * 4 + splits * 4,
    )

    out = pl.pallas_call(
        kernel,
        out_shape=jax.ShapeDtypeStruct((splits, 1, 1), jnp.float32),
        grid_spec=pltpu.PrefetchScalarGridSpec(
            num_scalar_prefetch=3,
            grid=(splits, tiles_per_split),
            in_specs=[
                # Whole tables resident in VMEM (constant block index -> one DMA).
                pl.BlockSpec((V, E), lambda s, t, *_: (0, 0)),   # emb_v
                pl.BlockSpec((V, E), lambda s, t, *_: (0, 0)),   # emb_u
            ],
            out_specs=pl.BlockSpec((1, 1, 1), lambda s, t, *_: (s, 0, 0)),
            scratch_shapes=[
                pltpu.VMEM((TB, E), emb_v.dtype),             # gathered center rows
                pltpu.VMEM(((K + 1) * TB, E), emb_u.dtype),   # pos + neg rows, k-major
                pltpu.VMEM((1, 1), jnp.float32),              # running partial sum
            ],
        ),
        compiler_params=pltpu.CompilerParams(
            dimension_semantics=("parallel", "arbitrary"),   # splits across TCs (v7x)
            vmem_limit_bytes=vmem_limit,
        ),
        cost_estimate=cost,
    )(c_ids, p_ids, n_ids, emb_v, emb_u)
    return jnp.sum(out)


def skipgram_neg_sampling_loss(center_words, pos_context, neg_context,
                               emb_v, emb_u, *, tile_b=256, num_splits=2,
                               max_rows_per_call=4096):
    """SGNS forward loss (matches the PyTorch module's forward).

    center_words: (B,) int, pos_context: (B,) int, neg_context: (B,K) int
    emb_v, emb_u: (V,E) embedding tables (float32 or bfloat16).
    tile_b: batch-tile size (bigger amortizes per-grid-step overhead).
    num_splits: leading "parallel" grid axis (use 2 to engage both v7x TCs).
    max_rows_per_call: batch chunk size per pallas_call, bounds SMEM usage of
                       the scalar-prefetched index arrays.
    """
    B = center_words.shape[0]
    assert emb_u.shape == emb_v.shape
    # TODO(synk): native bf16 staging; upcast keeps the dynamic row gather on
    # 32-bit layouts (f32 accumulate was already the compute path).
    emb_v = emb_v.astype(jnp.float32)
    emb_u = emb_u.astype(jnp.float32)

    loss = jnp.zeros((), jnp.float32)
    for start in range(0, B, int(max_rows_per_call)):
        stop = min(B, start + int(max_rows_per_call))
        loss = loss + _sgns_loss_chunk(
            center_words[start:stop], pos_context[start:stop],
            neg_context[start:stop], emb_v, emb_u,
            tile_b=tile_b, num_splits=num_splits)
    return loss


skipgram_loss_jit = jax.jit(
    skipgram_neg_sampling_loss,
    static_argnames=("tile_b", "num_splits", "max_rows_per_call"))


if __name__ == "__main__":
    vocab_size = 64
    embed_size = 128     # lane-dense: multiple of 128
    batch = 20           # not a multiple of tile_b -> exercises padding/masking
    num_neg = 5

    key = jax.random.PRNGKey(0)
    k_v, k_u, k_c, k_p, k_n = jax.random.split(key, 5)

    # nn.Embedding default init ~ N(0, 1)
    emb_v = jax.random.normal(k_v, (vocab_size, embed_size), dtype=jnp.float32)
    emb_u = jax.random.normal(k_u, (vocab_size, embed_size), dtype=jnp.float32)

    center_words = jax.random.randint(k_c, (batch,), 0, vocab_size)
    pos_context = jax.random.randint(k_p, (batch,), 0, vocab_size)
    neg_context = jax.random.randint(k_n, (batch, num_neg), 0, vocab_size)

    # Small tiles + small chunks + 2 splits -> exercises chunking, multi-tile
    # accumulation, empty padded tiles, and the parallel split axis.
    loss = skipgram_loss_jit(center_words, pos_context, neg_context,
                             emb_v, emb_u, tile_b=8, num_splits=2,
                             max_rows_per_call=12)
    jax.block_until_ready(loss)

    # plain-JAX reference (matches the PyTorch forward)
    ce = jnp.take(emb_v, center_words, axis=0)
    pe = jnp.take(emb_u, pos_context, axis=0)
    ne = jnp.take(emb_u, neg_context, axis=0)
    ref = -(jnp.sum(_logsigmoid(jnp.sum(pe * ce, axis=-1)))
            + jnp.sum(_logsigmoid(-jnp.einsum("bke,be->bk", ne, ce))))
    assert jnp.allclose(loss, ref, rtol=1e-5, atol=1e-3), (loss, ref)

    # bf16-table variant (tables upcast + staged in VMEM, f32 accumulate)
    loss_bf16 = skipgram_loss_jit(center_words, pos_context, neg_context,
                                  emb_v.astype(jnp.bfloat16),
                                  emb_u.astype(jnp.bfloat16),
                                  tile_b=8, num_splits=2, max_rows_per_call=12)
    jax.block_until_ready(loss_bf16)
    assert jnp.allclose(loss_bf16, ref, rtol=5e-2, atol=1.0), (loss_bf16, ref)

    # default (large-tile, single-chunk) path
    loss_default = skipgram_loss_jit(center_words, pos_context, neg_context,
                                     emb_v, emb_u)
    jax.block_until_ready(loss_default)
    assert jnp.allclose(loss_default, ref, rtol=1e-5, atol=1e-3), (loss_default, ref)

    print("KERNEL_OK")
</pallas_src>

<mosaic_0001>
module attributes {stable_mosaic.version = 11 : i64} {
  func.func @_sgns_kernel(%arg0: i32, %arg1: i32, %arg2: memref<16xi32, #tpu.memory_space<smem>>, %arg3: memref<16xi32, #tpu.memory_space<smem>>, %arg4: memref<80xi32, #tpu.memory_space<smem>>, %arg5: memref<64x128xf32, #tpu.memory_space<vmem>>, %arg6: memref<64x128xf32, #tpu.memory_space<vmem>>, %arg7: memref<1x1x1xf32, #tpu.memory_space<vmem>>, %arg8: memref<8x128xf32, #tpu.memory_space<vmem>>, %arg9: memref<48x128xf32, #tpu.memory_space<vmem>>, %arg10: memref<1x1xf32, #tpu.memory_space<vmem>>) attributes {dimension_semantics = [#tpu.dimension_semantics<parallel>, #tpu.dimension_semantics<arbitrary>], iteration_bounds = array<i64: 2, 1>, scalar_prefetch = 3 : i64, scratch_operands = 3 : i64, tpu.core_type = #tpu.core_type<tc>, window_params = [{pipeline_mode = #tpu.pipeline_mode<synchronous>, transform_indices = @transform_0, window_bounds = array<i64: 64, 128>}, {pipeline_mode = #tpu.pipeline_mode<synchronous>, transform_indices = @transform_1, window_bounds = array<i64: 64, 128>}, {transform_indices = @transform_2, window_bounds = array<i64: 1, 1, 1>}]} {
    %c1_i32 = arith.constant 1 : i32
    %0 = arith.muli %arg0, %c1_i32 : i32
    %1 = arith.addi %0, %arg1 : i32
    %c8_i32 = arith.constant 8 : i32
    %2 = arith.muli %1, %c8_i32 : i32
    %c0_i32 = arith.constant 0 : i32
    %3 = arith.cmpi eq, %arg1, %c0_i32 : i32
    %4 = arith.extui %3 : i1 to i32
    %c0_i32_0 = arith.constant 0 : i32
    %5 = arith.cmpi ne, %4, %c0_i32_0 : i32
    scf.if %5 {
      %cst_45 = arith.constant 0.000000e+00 : f32
      %114 = vector.broadcast %cst_45 : f32 to vector<1x1xf32>
      %c0_46 = arith.constant 0 : index
      %c0_47 = arith.constant 0 : index
      %115 = vector.load %arg10[%c0_46, %c0_47] : memref<1x1xf32, #tpu.memory_space<vmem>>, vector<1x1xf32>
      tpu.vector_store %arg10[%c0_46, %c0_47], %114 {strides = array<i32>} : memref<1x1xf32, #tpu.memory_space<vmem>>, vector<1x1xf32>,
    } else {
    }
    %c0_i32_1 = arith.constant 0 : i32
    %c8_i32_2 = arith.constant 8 : i32
    %6 = arith.addi %c0_i32_1, %c8_i32_2 : i32
    %c1_i32_3 = arith.constant 1 : i32
    scf.for %arg11 = %c0_i32_1 to %6 step %c1_i32_3  : i32 {
      %c1_i32_45 = arith.constant 1 : i32
      %114 = arith.muli %arg11, %c1_i32_45 : i32
      %c0_i32_46 = arith.constant 0 : i32
      %115 = arith.addi %c0_i32_46, %114 : i32
      %116 = arith.addi %2, %115 : i32
      %117 = arith.index_cast %116 : i32 to index
      %118 = memref.load %arg2[%117] : memref<16xi32, #tpu.memory_space<smem>>
      %119 = arith.addi %2, %115 : i32
      %120 = arith.index_cast %119 : i32 to index
      %121 = memref.load %arg3[%120] : memref<16xi32, #tpu.memory_space<smem>>
      %122 = arith.index_cast %118 : i32 to index
      %c0_47 = arith.constant 0 : index
      %123 = vector.load %arg5[%122, %c0_47] : memref<64x128xf32, #tpu.memory_space<vmem>>, vector<1x128xf32>
      %124 = arith.index_cast %115 : i32 to index
      %c0_48 = arith.constant 0 : index
      %125 = vector.load %arg8[%124, %c0_48] : memref<8x128xf32, #tpu.memory_space<vmem>>, vector<1x128xf32>
      tpu.vector_store %arg8[%124, %c0_48], %123 {strides = array<i32>} : memref<8x128xf32, #tpu.memory_space<vmem>>, vector<1x128xf32>,
      %126 = arith.index_cast %121 : i32 to index
      %c0_49 = arith.constant 0 : index
      %127 = vector.load %arg6[%126, %c0_49] : memref<64x128xf32, #tpu.memory_space<vmem>>, vector<1x128xf32>
      %128 = arith.index_cast %115 : i32 to index
      %c0_50 = arith.constant 0 : index
      %129 = vector.load %arg9[%128, %c0_50] : memref<48x128xf32, #tpu.memory_space<vmem>>, vector<1x128xf32>
      tpu.vector_store %arg9[%128, %c0_50], %127 {strides = array<i32>} : memref<48x128xf32, #tpu.memory_space<vmem>>, vector<1x128xf32>,
      %130 = arith.addi %2, %115 : i32
      %c5_i32 = arith.constant 5 : i32
      %131 = arith.muli %130, %c5_i32 : i32
      %c0_i32_51 = arith.constant 0 : i32
      %132 = arith.addi %131, %c0_i32_51 : i32
      %133 = arith.index_cast %132 : i32 to index
      %134 = memref.load %arg4[%133] : memref<80xi32, #tpu.memory_space<smem>>
      %135 = arith.index_cast %134 : i32 to index
      %c0_52 = arith.constant 0 : index
      %136 = vector.load %arg6[%135, %c0_52] : memref<64x128xf32, #tpu.memory_space<vmem>>, vector<1x128xf32>
      %c8_i32_53 = arith.constant 8 : i32
      %137 = arith.addi %c8_i32_53, %115 : i32
      %138 = arith.index_cast %137 : i32 to index
      %c0_54 = arith.constant 0 : index
      %139 = vector.load %arg9[%138, %c0_54] : memref<48x128xf32, #tpu.memory_space<vmem>>, vector<1x128xf32>
      tpu.vector_store %arg9[%138, %c0_54], %136 {strides = array<i32>} : memref<48x128xf32, #tpu.memory_space<vmem>>, vector<1x128xf32>,
      %140 = arith.addi %2, %115 : i32
      %c5_i32_55 = arith.constant 5 : i32
      %141 = arith.muli %140, %c5_i32_55 : i32
      %c1_i32_56 = arith.constant 1 : i32
      %142 = arith.addi %141, %c1_i32_56 : i32
      %143 = arith.index_cast %142 : i32 to index
      %144 = memref.load %arg4[%143] : memref<80xi32, #tpu.memory_space<smem>>
      %145 = arith.index_cast %144 : i32 to index
      %c0_57 = arith.constant 0 : index
      %146 = vector.load %arg6[%145, %c0_57] : memref<64x128xf32, #tpu.memory_space<vmem>>, vector<1x128xf32>
      %c16_i32 = arith.constant 16 : i32
      %147 = arith.addi %c16_i32, %115 : i32
      %148 = arith.index_cast %147 : i32 to index
      %c0_58 = arith.constant 0 : index
      %149 = vector.load %arg9[%148, %c0_58] : memref<48x128xf32, #tpu.memory_space<vmem>>, vector<1x128xf32>
      tpu.vector_store %arg9[%148, %c0_58], %146 {strides = array<i32>} : memref<48x128xf32, #tpu.memory_space<vmem>>, vector<1x128xf32>,
      %150 = arith.addi %2, %115 : i32
      %c5_i32_59 = arith.constant 5 : i32
      %151 = arith.muli %150, %c5_i32_59 : i32
      %c2_i32 = arith.constant 2 : i32
      %152 = arith.addi %151, %c2_i32 : i32
      %153 = arith.index_cast %152 : i32 to index
      %154 = memref.load %arg4[%153] : memref<80xi32, #tpu.memory_space<smem>>
      %155 = arith.index_cast %154 : i32 to index
      %c0_60 = arith.constant 0 : index
      %156 = vector.load %arg6[%155, %c0_60] : memref<64x128xf32, #tpu.memory_space<vmem>>, vector<1x128xf32>
      %c24_i32 = arith.constant 24 : i32
      %157 = arith.addi %c24_i32, %115 : i32
      %158 = arith.index_cast %157 : i32 to index
      %c0_61 = arith.constant 0 : index
      %159 = vector.load %arg9[%158, %c0_61] : memref<48x128xf32, #tpu.memory_space<vmem>>, vector<1x128xf32>
      tpu.vector_store %arg9[%158, %c0_61], %156 {strides = array<i32>} : memref<48x128xf32, #tpu.memory_space<vmem>>, vector<1x128xf32>,
      %160 = arith.addi %2, %115 : i32
      %c5_i32_62 = arith.constant 5 : i32
      %161 = arith.muli %160, %c5_i32_62 : i32
      %c3_i32 = arith.constant 3 : i32
      %162 = arith.addi %161, %c3_i32 : i32
      %163 = arith.index_cast %162 : i32 to index
      %164 = memref.load %arg4[%163] : memref<80xi32, #tpu.memory_space<smem>>
      %165 = arith.index_cast %164 : i32 to index
      %c0_63 = arith.constant 0 : index
      %166 = vector.load %arg6[%165, %c0_63] : memref<64x128xf32, #tpu.memory_space<vmem>>, vector<1x128xf32>
      %c32_i32 = arith.constant 32 : i32
      %167 = arith.addi %c32_i32, %115 : i32
      %168 = arith.index_cast %167 : i32 to index
      %c0_64 = arith.constant 0 : index
      %169 = vector.load %arg9[%168, %c0_64] : memref<48x128xf32, #tpu.memory_space<vmem>>, vector<1x128xf32>
      tpu.vector_store %arg9[%168, %c0_64], %166 {strides = array<i32>} : memref<48x128xf32, #tpu.memory_space<vmem>>, vector<1x128xf32>,
      %170 = arith.addi %2, %115 : i32
      %c5_i32_65 = arith.constant 5 : i32
      %171 = arith.muli %170, %c5_i32_65 : i32
      %c4_i32 = arith.constant 4 : i32
      %172 = arith.addi %171, %c4_i32 : i32
      %173 = arith.index_cast %172 : i32 to index
      %174 = memref.load %arg4[%173] : memref<80xi32, #tpu.memory_space<smem>>
      %175 = arith.index_cast %174 : i32 to index
      %c0_66 = arith.constant 0 : index
      %176 = vector.load %arg6[%175, %c0_66] : memref<64x128xf32, #tpu.memory_space<vmem>>, vector<1x128xf32>
      %c40_i32 = arith.constant 40 : i32
      %177 = arith.addi %c40_i32, %115 : i32
      %178 = arith.index_cast %177 : i32 to index
      %c0_67 = arith.constant 0 : index
      %179 = vector.load %arg9[%178, %c0_67] : memref<48x128xf32, #tpu.memory_space<vmem>>, vector<1x128xf32>
      tpu.vector_store %arg9[%178, %c0_67], %176 {strides = array<i32>} : memref<48x128xf32, #tpu.memory_space<vmem>>, vector<1x128xf32>,
    }
    %c8_i32_4 = arith.constant 8 : i32
    %c0 = arith.constant 0 : index
    %c0_5 = arith.constant 0 : index
    %7 = vector.load %arg8[%c0, %c0_5] : memref<8x128xf32, #tpu.memory_space<vmem>>, vector<8x128xf32>
    %c0_6 = arith.constant 0 : index
    %c0_7 = arith.constant 0 : index
    %8 = vector.load %arg9[%c0_6, %c0_7] : memref<48x128xf32, #tpu.memory_space<vmem>>, vector<8x128xf32>
    %9 = arith.mulf %8, %7 : vector<8x128xf32>
    %cst = arith.constant dense<0.000000e+00> : vector<8xf32>
    %10 = vector.multi_reduction <add>, %9, %cst [1] : vector<8x128xf32> to vector<8xf32>
    %11 = vector.shape_cast %10 : vector<8xf32> to vector<8x1xf32>
    %cst_8 = arith.constant 0.000000e+00 : f32
    %12 = vector.broadcast %cst_8 : f32 to vector<8x1xf32>
    %13 = arith.minimumf %11, %12 : vector<8x1xf32>
    %14 = math.absf %11 : vector<8x1xf32>
    %cst_9 = arith.constant 0.000000e+00 : f32
    %15 = vector.broadcast %cst_9 : f32 to vector<8x1xf32>
    %16 = arith.subf %15, %14 : vector<8x1xf32>
    %17 = math.exp %16 : vector<8x1xf32>
    %18 = math.log1p %17 : vector<8x1xf32>
    %19 = arith.subf %13, %18 : vector<8x1xf32>
    %c8 = arith.constant 8 : index
    %c0_10 = arith.constant 0 : index
    %20 = vector.load %arg9[%c8, %c0_10] : memref<48x128xf32, #tpu.memory_space<vmem>>, vector<8x128xf32>
    %21 = arith.mulf %20, %7 : vector<8x128xf32>
    %cst_11 = arith.constant dense<0.000000e+00> : vector<8xf32>
    %22 = vector.multi_reduction <add>, %21, %cst_11 [1] : vector<8x128xf32> to vector<8xf32>
    %23 = vector.shape_cast %22 : vector<8xf32> to vector<8x1xf32>
    %cst_12 = arith.constant 0.000000e+00 : f32
    %24 = vector.broadcast %cst_12 : f32 to vector<8x1xf32>
    %25 = arith.subf %24, %23 : vector<8x1xf32>
    %cst_13 = arith.constant 0.000000e+00 : f32
    %26 = vector.broadcast %cst_13 : f32 to vector<8x1xf32>
    %27 = arith.minimumf %25, %26 : vector<8x1xf32>
    %28 = math.absf %25 : vector<8x1xf32>
    %cst_14 = arith.constant 0.000000e+00 : f32
    %29 = vector.broadcast %cst_14 : f32 to vector<8x1xf32>
    %30 = arith.subf %29, %28 : vector<8x1xf32>
    %31 = math.exp %30 : vector<8x1xf32>
    %32 = math.log1p %31 : vector<8x1xf32>
    %33 = arith.subf %27, %32 : vector<8x1xf32>
    %34 = arith.addf %19, %33 : vector<8x1xf32>
    %c16 = arith.constant 16 : index
    %c0_15 = arith.constant 0 : index
    %35 = vector.load %arg9[%c16, %c0_15] : memref<48x128xf32, #tpu.memory_space<vmem>>, vector<8x128xf32>
    %36 = arith.mulf %35, %7 : vector<8x128xf32>
    %cst_16 = arith.constant dense<0.000000e+00> : vector<8xf32>
    %37 = vector.multi_reduction <add>, %36, %cst_16 [1] : vector<8x128xf32> to vector<8xf32>
    %38 = vector.shape_cast %37 : vector<8xf32> to vector<8x1xf32>
    %cst_17 = arith.constant 0.000000e+00 : f32
    %39 = vector.broadcast %cst_17 : f32 to vector<8x1xf32>
    %40 = arith.subf %39, %38 : vector<8x1xf32>
    %cst_18 = arith.constant 0.000000e+00 : f32
    %41 = vector.broadcast %cst_18 : f32 to vector<8x1xf32>
    %42 = arith.minimumf %40, %41 : vector<8x1xf32>
    %43 = math.absf %40 : vector<8x1xf32>
    %cst_19 = arith.constant 0.000000e+00 : f32
    %44 = vector.broadcast %cst_19 : f32 to vector<8x1xf32>
    %45 = arith.subf %44, %43 : vector<8x1xf32>
    %46 = math.exp %45 : vector<8x1xf32>
    %47 = math.log1p %46 : vector<8x1xf32>
    %48 = arith.subf %42, %47 : vector<8x1xf32>
    %49 = arith.addf %34, %48 : vector<8x1xf32>
    %c24 = arith.constant 24 : index
    %c0_20 = arith.constant 0 : index
    %50 = vector.load %arg9[%c24, %c0_20] : memref<48x128xf32, #tpu.memory_space<vmem>>, vector<8x128xf32>
    %51 = arith.mulf %50, %7 : vector<8x128xf32>
    %cst_21 = arith.constant dense<0.000000e+00> : vector<8xf32>
    %52 = vector.multi_reduction <add>, %51, %cst_21 [1] : vector<8x128xf32> to vector<8xf32>
    %53 = vector.shape_cast %52 : vector<8xf32> to vector<8x1xf32>
    %cst_22 = arith.constant 0.000000e+00 : f32
    %54 = vector.broadcast %cst_22 : f32 to vector<8x1xf32>
    %55 = arith.subf %54, %53 : vector<8x1xf32>
    %cst_23 = arith.constant 0.000000e+00 : f32
    %56 = vector.broadcast %cst_23 : f32 to vector<8x1xf32>
    %57 = arith.minimumf %55, %56 : vector<8x1xf32>
    %58 = math.absf %55 : vector<8x1xf32>
    %cst_24 = arith.constant 0.000000e+00 : f32
    %59 = vector.broadcast %cst_24 : f32 to vector<8x1xf32>
    %60 = arith.subf %59, %58 : vector<8x1xf32>
    %61 = math.exp %60 : vector<8x1xf32>
    %62 = math.log1p %61 : vector<8x1xf32>
    %63 = arith.subf %57, %62 : vector<8x1xf32>
    %64 = arith.addf %49, %63 : vector<8x1xf32>
    %c32 = arith.constant 32 : index
    %c0_25 = arith.constant 0 : index
    %65 = vector.load %arg9[%c32, %c0_25] : memref<48x128xf32, #tpu.memory_space<vmem>>, vector<8x128xf32>
    %66 = arith.mulf %65, %7 : vector<8x128xf32>
    %cst_26 = arith.constant dense<0.000000e+00> : vector<8xf32>
    %67 = vector.multi_reduction <add>, %66, %cst_26 [1] : vector<8x128xf32> to vector<8xf32>
    %68 = vector.shape_cast %67 : vector<8xf32> to vector<8x1xf32>
    %cst_27 = arith.constant 0.000000e+00 : f32
    %69 = vector.broadcast %cst_27 : f32 to vector<8x1xf32>
    %70 = arith.subf %69, %68 : vector<8x1xf32>
    %cst_28 = arith.constant 0.000000e+00 : f32
    %71 = vector.broadcast %cst_28 : f32 to vector<8x1xf32>
    %72 = arith.minimumf %70, %71 : vector<8x1xf32>
    %73 = math.absf %70 : vector<8x1xf32>
    %cst_29 = arith.constant 0.000000e+00 : f32
    %74 = vector.broadcast %cst_29 : f32 to vector<8x1xf32>
    %75 = arith.subf %74, %73 : vector<8x1xf32>
    %76 = math.exp %75 : vector<8x1xf32>
    %77 = math.log1p %76 : vector<8x1xf32>
    %78 = arith.subf %72, %77 : vector<8x1xf32>
    %79 = arith.addf %64, %78 : vector<8x1xf32>
    %c40 = arith.constant 40 : index
    %c0_30 = arith.constant 0 : index
    %80 = vector.load %arg9[%c40, %c0_30] : memref<48x128xf32, #tpu.memory_space<vmem>>, vector<8x128xf32>
    %81 = arith.mulf %80, %7 : vector<8x128xf32>
    %cst_31 = arith.constant dense<0.000000e+00> : vector<8xf32>
    %82 = vector.multi_reduction <add>, %81, %cst_31 [1] : vector<8x128xf32> to vector<8xf32>
    %83 = vector.shape_cast %82 : vector<8xf32> to vector<8x1xf32>
    %cst_32 = arith.constant 0.000000e+00 : f32
    %84 = vector.broadcast %cst_32 : f32 to vector<8x1xf32>
    %85 = arith.subf %84, %83 : vector<8x1xf32>
    %cst_33 = arith.constant 0.000000e+00 : f32
    %86 = vector.broadcast %cst_33 : f32 to vector<8x1xf32>
    %87 = arith.minimumf %85, %86 : vector<8x1xf32>
    %88 = math.absf %85 : vector<8x1xf32>
    %cst_34 = arith.constant 0.000000e+00 : f32
    %89 = vector.broadcast %cst_34 : f32 to vector<8x1xf32>
    %90 = arith.subf %89, %88 : vector<8x1xf32>
    %91 = math.exp %90 : vector<8x1xf32>
    %92 = math.log1p %91 : vector<8x1xf32>
    %93 = arith.subf %87, %92 : vector<8x1xf32>
    %94 = arith.addf %79, %93 : vector<8x1xf32>
    %c12_i32 = arith.constant 12 : i32
    %95 = arith.subi %c12_i32, %2 : i32
    %c0_i32_35 = arith.constant 0 : i32
    %c8_i32_36 = arith.constant 8 : i32
    %96 = arith.maxsi %c0_i32_35, %95 : i32
    %97 = arith.minsi %c8_i32_36, %96 : i32
    %98 = tpu.iota {dimensions = array<i32: 0>} : vector<8x1xi32>
    %99 = vector.broadcast %97 : i32 to vector<8x1xi32>
    %100 = arith.cmpi slt, %98, %99 : vector<8x1xi32>
    %cst_37 = arith.constant 0.000000e+00 : f32
    %101 = vector.broadcast %cst_37 : f32 to vector<8x1xf32>
    %102 = arith.select %100, %94, %101 : vector<8x1xi1>, vector<8x1xf32>
    %c0_38 = arith.constant 0 : index
    %c0_39 = arith.constant 0 : index
    %103 = vector.load %arg10[%c0_38, %c0_39] : memref<1x1xf32, #tpu.memory_space<vmem>>, vector<1x1xf32>
    %104 = vector.shape_cast %102 : vector<8x1xf32> to vector<1x8x1xf32>
    %cst_40 = arith.constant dense<0.000000e+00> : vector<1xf32>
    %105 = vector.multi_reduction <add>, %104, %cst_40 [1, 2] : vector<1x8x1xf32> to vector<1xf32>
    %106 = vector.shape_cast %105 : vector<1xf32> to vector<1x1x1xf32>
    %107 = vector.extract %106[0, 0, 0] : f32 from vector<1x1x1xf32>
    %108 = vector.broadcast %107 : f32 to vector<1x1xf32>
    %109 = arith.addf %103, %108 : vector<1x1xf32>
    %c0_41 = arith.constant 0 : index
    %c0_42 = arith.constant 0 : index
    %110 = vector.load %arg10[%c0_41, %c0_42] : memref<1x1xf32, #tpu.memory_space<vmem>>, vector<1x1xf32>
    tpu.vector_store %arg10[%c0_41, %c0_42], %109 {strides = array<i32>} : memref<1x1xf32, #tpu.memory_space<vmem>>, vector<1x1xf32>,
    %c0_i32_43 = arith.constant 0 : i32
    %111 = arith.cmpi eq, %arg1, %c0_i32_43 : i32
    %112 = arith.extui %111 : i1 to i32
    %c0_i32_44 = arith.constant 0 : i32
    %113 = arith.cmpi ne, %112, %c0_i32_44 : i32
    scf.if %113 {
      %c0_45 = arith.constant 0 : index
      %c0_46 = arith.constant 0 : index
      %114 = vector.load %arg10[%c0_45, %c0_46] : memref<1x1xf32, #tpu.memory_space<vmem>>, vector<1x1xf32>
      %cst_47 = arith.constant 0.000000e+00 : f32
      %115 = vector.broadcast %cst_47 : f32 to vector<1x1xf32>
      %116 = arith.subf %115, %114 : vector<1x1xf32>
      %117 = vector.shape_cast %116 : vector<1x1xf32> to vector<1x1x1xf32>
      %c0_48 = arith.constant 0 : index
      %c0_49 = arith.constant 0 : index
      %c0_50 = arith.constant 0 : index
      %118 = vector.load %arg7[%c0_48, %c0_49, %c0_50] : memref<1x1x1xf32, #tpu.memory_space<vmem>>, vector<1x1x1xf32>
      tpu.vector_store %arg7[%c0_48, %c0_49, %c0_50], %117 {strides = array<i32>} : memref<1x1x1xf32, #tpu.memory_space<vmem>>, vector<1x1x1xf32>,
    } else {
    }
    return
  }
  func.func @transform_0(%arg0: i32, %arg1: i32, %arg2: memref<16xi32, #tpu.memory_space<smem>>, %arg3: memref<16xi32, #tpu.memory_space<smem>>, %arg4: memref<80xi32, #tpu.memory_space<smem>>) -> (i32, i32) {
    %c0_i32 = arith.constant 0 : i32
    %c0_i32_0 = arith.constant 0 : i32
    %c0_i32_1 = arith.constant 0 : i32
    return %c0_i32, %c0_i32_0 : i32, i32
  }
  func.func @transform_1(%arg0: i32, %arg1: i32, %arg2: memref<16xi32, #tpu.memory_space<smem>>, %arg3: memref<16xi32, #tpu.memory_space<smem>>, %arg4: memref<80xi32, #tpu.memory_space<smem>>) -> (i32, i32) {
    %c0_i32 = arith.constant 0 : i32
    %c0_i32_0 = arith.constant 0 : i32
    %c0_i32_1 = arith.constant 0 : i32
    return %c0_i32, %c0_i32_0 : i32, i32
  }
  func.func @transform_2(%arg0: i32, %arg1: i32, %arg2: memref<16xi32, #tpu.memory_space<smem>>, %arg3: memref<16xi32, #tpu.memory_space<smem>>, %arg4: memref<80xi32, #tpu.memory_space<smem>>) -> (i32, i32, i32) {
    %c0_i32 = arith.constant 0 : i32
    %c0_i32_0 = arith.constant 0 : i32
    %c0_i32_1 = arith.constant 0 : i32
    return %arg0, %c0_i32, %c0_i32_0 : i32, i32, i32
  }
}

module attributes {stable_mosaic.version = 11 : i64} {
  func.func @_sgns_kernel(%arg0: i32, %arg1: i32, %arg2: memref<8xi32, #tpu.memory_space<smem>>, %arg3: memref<8xi32, #tpu.memory_space<smem>>, %arg4: memref<40xi32, #tpu.memory_space<smem>>, %arg5: memref<64x128xf32, #tpu.memory_space<vmem>>, %arg6: memref<64x128xf32, #tpu.memory_space<vmem>>, %arg7: memref<1x1x1xf32, #tpu.memory_space<vmem>>, %arg8: memref<8x128xf32, #tpu.memory_space<vmem>>, %arg9: memref<48x128xf32, #tpu.memory_space<vmem>>, %arg10: memref<1x1xf32, #tpu.memory_space<vmem>>) attributes {dimension_semantics = [#tpu.dimension_semantics<parallel>, #tpu.dimension_semantics<arbitrary>], iteration_bounds = array<i64: 1, 1>, scalar_prefetch = 3 : i64, scratch_operands = 3 : i64, tpu.core_type = #tpu.core_type<tc>, window_params = [{pipeline_mode = #tpu.pipeline_mode<synchronous>, transform_indices = @transform_0, window_bounds = array<i64: 64, 128>}, {pipeline_mode = #tpu.pipeline_mode<synchronous>, transform_indices = @transform_1, window_bounds = array<i64: 64, 128>}, {transform_indices = @transform_2, window_bounds = array<i64: 1, 1, 1>}]} {
    %c1_i32 = arith.constant 1 : i32
    %0 = arith.muli %arg0, %c1_i32 : i32
    %1 = arith.addi %0, %arg1 : i32
    %c8_i32 = arith.constant 8 : i32
    %2 = arith.muli %1, %c8_i32 : i32
    %c0_i32 = arith.constant 0 : i32
    %3 = arith.cmpi eq, %arg1, %c0_i32 : i32
    %4 = arith.extui %3 : i1 to i32
    %c0_i32_0 = arith.constant 0 : i32
    %5 = arith.cmpi ne, %4, %c0_i32_0 : i32
    scf.if %5 {
      %cst_46 = arith.constant 0.000000e+00 : f32
      %114 = vector.broadcast %cst_46 : f32 to vector<1x1xf32>
      %c0_47 = arith.constant 0 : index
      %c0_48 = arith.constant 0 : index
      %115 = vector.load %arg10[%c0_47, %c0_48] : memref<1x1xf32, #tpu.memory_space<vmem>>, vector<1x1xf32>
      tpu.vector_store %arg10[%c0_47, %c0_48], %114 {strides = array<i32>} : memref<1x1xf32, #tpu.memory_space<vmem>>, vector<1x1xf32>,
    } else {
    }
    %c0_i32_1 = arith.constant 0 : i32
    %c8_i32_2 = arith.constant 8 : i32
    %6 = arith.addi %c0_i32_1, %c8_i32_2 : i32
    %c1_i32_3 = arith.constant 1 : i32
    scf.for %arg11 = %c0_i32_1 to %6 step %c1_i32_3  : i32 {
      %c1_i32_46 = arith.constant 1 : i32
      %114 = arith.muli %arg11, %c1_i32_46 : i32
      %c0_i32_47 = arith.constant 0 : i32
      %115 = arith.addi %c0_i32_47, %114 : i32
      %116 = arith.addi %2, %115 : i32
      %117 = arith.index_cast %116 : i32 to index
      %118 = memref.load %arg2[%117] : memref<8xi32, #tpu.memory_space<smem>>
      %119 = arith.addi %2, %115 : i32
      %120 = arith.index_cast %119 : i32 to index
      %121 = memref.load %arg3[%120] : memref<8xi32, #tpu.memory_space<smem>>
      %122 = arith.index_cast %118 : i32 to index
      %c0_48 = arith.constant 0 : index
      %123 = vector.load %arg5[%122, %c0_48] : memref<64x128xf32, #tpu.memory_space<vmem>>, vector<1x128xf32>
      %124 = arith.index_cast %115 : i32 to index
      %c0_49 = arith.constant 0 : index
      %125 = vector.load %arg8[%124, %c0_49] : memref<8x128xf32, #tpu.memory_space<vmem>>, vector<1x128xf32>
      tpu.vector_store %arg8[%124, %c0_49], %123 {strides = array<i32>} : memref<8x128xf32, #tpu.memory_space<vmem>>, vector<1x128xf32>,
      %126 = arith.index_cast %121 : i32 to index
      %c0_50 = arith.constant 0 : index
      %127 = vector.load %arg6[%126, %c0_50] : memref<64x128xf32, #tpu.memory_space<vmem>>, vector<1x128xf32>
      %128 = arith.index_cast %115 : i32 to index
      %c0_51 = arith.constant 0 : index
      %129 = vector.load %arg9[%128, %c0_51] : memref<48x128xf32, #tpu.memory_space<vmem>>, vector<1x128xf32>
      tpu.vector_store %arg9[%128, %c0_51], %127 {strides = array<i32>} : memref<48x128xf32, #tpu.memory_space<vmem>>, vector<1x128xf32>,
      %130 = arith.addi %2, %115 : i32
      %c5_i32 = arith.constant 5 : i32
      %131 = arith.muli %130, %c5_i32 : i32
      %c0_i32_52 = arith.constant 0 : i32
      %132 = arith.addi %131, %c0_i32_52 : i32
      %133 = arith.index_cast %132 : i32 to index
      %134 = memref.load %arg4[%133] : memref<40xi32, #tpu.memory_space<smem>>
      %135 = arith.index_cast %134 : i32 to index
      %c0_53 = arith.constant 0 : index
      %136 = vector.load %arg6[%135, %c0_53] : memref<64x128xf32, #tpu.memory_space<vmem>>, vector<1x128xf32>
      %c8_i32_54 = arith.constant 8 : i32
      %137 = arith.addi %c8_i32_54, %115 : i32
      %138 = arith.index_cast %137 : i32 to index
      %c0_55 = arith.constant 0 : index
      %139 = vector.load %arg9[%138, %c0_55] : memref<48x128xf32, #tpu.memory_space<vmem>>, vector<1x128xf32>
      tpu.vector_store %arg9[%138, %c0_55], %136 {strides = array<i32>} : memref<48x128xf32, #tpu.memory_space<vmem>>, vector<1x128xf32>,
      %140 = arith.addi %2, %115 : i32
      %c5_i32_56 = arith.constant 5 : i32
      %141 = arith.muli %140, %c5_i32_56 : i32
      %c1_i32_57 = arith.constant 1 : i32
      %142 = arith.addi %141, %c1_i32_57 : i32
      %143 = arith.index_cast %142 : i32 to index
      %144 = memref.load %arg4[%143] : memref<40xi32, #tpu.memory_space<smem>>
      %145 = arith.index_cast %144 : i32 to index
      %c0_58 = arith.constant 0 : index
      %146 = vector.load %arg6[%145, %c0_58] : memref<64x128xf32, #tpu.memory_space<vmem>>, vector<1x128xf32>
      %c16_i32 = arith.constant 16 : i32
      %147 = arith.addi %c16_i32, %115 : i32
      %148 = arith.index_cast %147 : i32 to index
      %c0_59 = arith.constant 0 : index
      %149 = vector.load %arg9[%148, %c0_59] : memref<48x128xf32, #tpu.memory_space<vmem>>, vector<1x128xf32>
      tpu.vector_store %arg9[%148, %c0_59], %146 {strides = array<i32>} : memref<48x128xf32, #tpu.memory_space<vmem>>, vector<1x128xf32>,
      %150 = arith.addi %2, %115 : i32
      %c5_i32_60 = arith.constant 5 : i32
      %151 = arith.muli %150, %c5_i32_60 : i32
      %c2_i32 = arith.constant 2 : i32
      %152 = arith.addi %151, %c2_i32 : i32
      %153 = arith.index_cast %152 : i32 to index
      %154 = memref.load %arg4[%153] : memref<40xi32, #tpu.memory_space<smem>>
      %155 = arith.index_cast %154 : i32 to index
      %c0_61 = arith.constant 0 : index
      %156 = vector.load %arg6[%155, %c0_61] : memref<64x128xf32, #tpu.memory_space<vmem>>, vector<1x128xf32>
      %c24_i32 = arith.constant 24 : i32
      %157 = arith.addi %c24_i32, %115 : i32
      %158 = arith.index_cast %157 : i32 to index
      %c0_62 = arith.constant 0 : index
      %159 = vector.load %arg9[%158, %c0_62] : memref<48x128xf32, #tpu.memory_space<vmem>>, vector<1x128xf32>
      tpu.vector_store %arg9[%158, %c0_62], %156 {strides = array<i32>} : memref<48x128xf32, #tpu.memory_space<vmem>>, vector<1x128xf32>,
      %160 = arith.addi %2, %115 : i32
      %c5_i32_63 = arith.constant 5 : i32
      %161 = arith.muli %160, %c5_i32_63 : i32
      %c3_i32 = arith.constant 3 : i32
      %162 = arith.addi %161, %c3_i32 : i32
      %163 = arith.index_cast %162 : i32 to index
      %164 = memref.load %arg4[%163] : memref<40xi32, #tpu.memory_space<smem>>
      %165 = arith.index_cast %164 : i32 to index
      %c0_64 = arith.constant 0 : index
      %166 = vector.load %arg6[%165, %c0_64] : memref<64x128xf32, #tpu.memory_space<vmem>>, vector<1x128xf32>
      %c32_i32 = arith.constant 32 : i32
      %167 = arith.addi %c32_i32, %115 : i32
      %168 = arith.index_cast %167 : i32 to index
      %c0_65 = arith.constant 0 : index
      %169 = vector.load %arg9[%168, %c0_65] : memref<48x128xf32, #tpu.memory_space<vmem>>, vector<1x128xf32>
      tpu.vector_store %arg9[%168, %c0_65], %166 {strides = array<i32>} : memref<48x128xf32, #tpu.memory_space<vmem>>, vector<1x128xf32>,
      %170 = arith.addi %2, %115 : i32
      %c5_i32_66 = arith.constant 5 : i32
      %171 = arith.muli %170, %c5_i32_66 : i32
      %c4_i32 = arith.constant 4 : i32
      %172 = arith.addi %171, %c4_i32 : i32
      %173 = arith.index_cast %172 : i32 to index
      %174 = memref.load %arg4[%173] : memref<40xi32, #tpu.memory_space<smem>>
      %175 = arith.index_cast %174 : i32 to index
      %c0_67 = arith.constant 0 : index
      %176 = vector.load %arg6[%175, %c0_67] : memref<64x128xf32, #tpu.memory_space<vmem>>, vector<1x128xf32>
      %c40_i32 = arith.constant 40 : i32
      %177 = arith.addi %c40_i32, %115 : i32
      %178 = arith.index_cast %177 : i32 to index
      %c0_68 = arith.constant 0 : index
      %179 = vector.load %arg9[%178, %c0_68] : memref<48x128xf32, #tpu.memory_space<vmem>>, vector<1x128xf32>
      tpu.vector_store %arg9[%178, %c0_68], %176 {strides = array<i32>} : memref<48x128xf32, #tpu.memory_space<vmem>>, vector<1x128xf32>,
    }
    %c8_i32_4 = arith.constant 8 : i32
    %c0 = arith.constant 0 : index
    %c0_5 = arith.constant 0 : index
    %7 = vector.load %arg8[%c0, %c0_5] : memref<8x128xf32, #tpu.memory_space<vmem>>, vector<8x128xf32>
    %c0_6 = arith.constant 0 : index
    %c0_7 = arith.constant 0 : index
    %8 = vector.load %arg9[%c0_6, %c0_7] : memref<48x128xf32, #tpu.memory_space<vmem>>, vector<8x128xf32>
    %9 = arith.mulf %8, %7 : vector<8x128xf32>
    %cst = arith.constant dense<0.000000e+00> : vector<8xf32>
    %10 = vector.multi_reduction <add>, %9, %cst [1] : vector<8x128xf32> to vector<8xf32>
    %11 = vector.shape_cast %10 : vector<8xf32> to vector<8x1xf32>
    %cst_8 = arith.constant 0.000000e+00 : f32
    %12 = vector.broadcast %cst_8 : f32 to vector<8x1xf32>
    %13 = arith.minimumf %11, %12 : vector<8x1xf32>
    %14 = math.absf %11 : vector<8x1xf32>
    %cst_9 = arith.constant 0.000000e+00 : f32
    %15 = vector.broadcast %cst_9 : f32 to vector<8x1xf32>
    %16 = arith.subf %15, %14 : vector<8x1xf32>
    %17 = math.exp %16 : vector<8x1xf32>
    %18 = math.log1p %17 : vector<8x1xf32>
    %19 = arith.subf %13, %18 : vector<8x1xf32>
    %c8 = arith.constant 8 : index
    %c0_10 = arith.constant 0 : index
    %20 = vector.load %arg9[%c8, %c0_10] : memref<48x128xf32, #tpu.memory_space<vmem>>, vector<8x128xf32>
    %21 = arith.mulf %20, %7 : vector<8x128xf32>
    %cst_11 = arith.constant dense<0.000000e+00> : vector<8xf32>
    %22 = vector.multi_reduction <add>, %21, %cst_11 [1] : vector<8x128xf32> to vector<8xf32>
    %23 = vector.shape_cast %22 : vector<8xf32> to vector<8x1xf32>
    %cst_12 = arith.constant 0.000000e+00 : f32
    %24 = vector.broadcast %cst_12 : f32 to vector<8x1xf32>
    %25 = arith.subf %24, %23 : vector<8x1xf32>
    %cst_13 = arith.constant 0.000000e+00 : f32
    %26 = vector.broadcast %cst_13 : f32 to vector<8x1xf32>
    %27 = arith.minimumf %25, %26 : vector<8x1xf32>
    %28 = math.absf %25 : vector<8x1xf32>
    %cst_14 = arith.constant 0.000000e+00 : f32
    %29 = vector.broadcast %cst_14 : f32 to vector<8x1xf32>
    %30 = arith.subf %29, %28 : vector<8x1xf32>
    %31 = math.exp %30 : vector<8x1xf32>
    %32 = math.log1p %31 : vector<8x1xf32>
    %33 = arith.subf %27, %32 : vector<8x1xf32>
    %34 = arith.addf %19, %33 : vector<8x1xf32>
    %c16 = arith.constant 16 : index
    %c0_15 = arith.constant 0 : index
    %35 = vector.load %arg9[%c16, %c0_15] : memref<48x128xf32, #tpu.memory_space<vmem>>, vector<8x128xf32>
    %36 = arith.mulf %35, %7 : vector<8x128xf32>
    %cst_16 = arith.constant dense<0.000000e+00> : vector<8xf32>
    %37 = vector.multi_reduction <add>, %36, %cst_16 [1] : vector<8x128xf32> to vector<8xf32>
    %38 = vector.shape_cast %37 : vector<8xf32> to vector<8x1xf32>
    %cst_17 = arith.constant 0.000000e+00 : f32
    %39 = vector.broadcast %cst_17 : f32 to vector<8x1xf32>
    %40 = arith.subf %39, %38 : vector<8x1xf32>
    %cst_18 = arith.constant 0.000000e+00 : f32
    %41 = vector.broadcast %cst_18 : f32 to vector<8x1xf32>
    %42 = arith.minimumf %40, %41 : vector<8x1xf32>
    %43 = math.absf %40 : vector<8x1xf32>
    %cst_19 = arith.constant 0.000000e+00 : f32
    %44 = vector.broadcast %cst_19 : f32 to vector<8x1xf32>
    %45 = arith.subf %44, %43 : vector<8x1xf32>
    %46 = math.exp %45 : vector<8x1xf32>
    %47 = math.log1p %46 : vector<8x1xf32>
    %48 = arith.subf %42, %47 : vector<8x1xf32>
    %49 = arith.addf %34, %48 : vector<8x1xf32>
    %c24 = arith.constant 24 : index
    %c0_20 = arith.constant 0 : index
    %50 = vector.load %arg9[%c24, %c0_20] : memref<48x128xf32, #tpu.memory_space<vmem>>, vector<8x128xf32>
    %51 = arith.mulf %50, %7 : vector<8x128xf32>
    %cst_21 = arith.constant dense<0.000000e+00> : vector<8xf32>
    %52 = vector.multi_reduction <add>, %51, %cst_21 [1] : vector<8x128xf32> to vector<8xf32>
    %53 = vector.shape_cast %52 : vector<8xf32> to vector<8x1xf32>
    %cst_22 = arith.constant 0.000000e+00 : f32
    %54 = vector.broadcast %cst_22 : f32 to vector<8x1xf32>
    %55 = arith.subf %54, %53 : vector<8x1xf32>
    %cst_23 = arith.constant 0.000000e+00 : f32
    %56 = vector.broadcast %cst_23 : f32 to vector<8x1xf32>
    %57 = arith.minimumf %55, %56 : vector<8x1xf32>
    %58 = math.absf %55 : vector<8x1xf32>
    %cst_24 = arith.constant 0.000000e+00 : f32
    %59 = vector.broadcast %cst_24 : f32 to vector<8x1xf32>
    %60 = arith.subf %59, %58 : vector<8x1xf32>
    %61 = math.exp %60 : vector<8x1xf32>
    %62 = math.log1p %61 : vector<8x1xf32>
    %63 = arith.subf %57, %62 : vector<8x1xf32>
    %64 = arith.addf %49, %63 : vector<8x1xf32>
    %c32 = arith.constant 32 : index
    %c0_25 = arith.constant 0 : index
    %65 = vector.load %arg9[%c32, %c0_25] : memref<48x128xf32, #tpu.memory_space<vmem>>, vector<8x128xf32>
    %66 = arith.mulf %65, %7 : vector<8x128xf32>
    %cst_26 = arith.constant dense<0.000000e+00> : vector<8xf32>
    %67 = vector.multi_reduction <add>, %66, %cst_26 [1] : vector<8x128xf32> to vector<8xf32>
    %68 = vector.shape_cast %67 : vector<8xf32> to vector<8x1xf32>
    %cst_27 = arith.constant 0.000000e+00 : f32
    %69 = vector.broadcast %cst_27 : f32 to vector<8x1xf32>
    %70 = arith.subf %69, %68 : vector<8x1xf32>
    %cst_28 = arith.constant 0.000000e+00 : f32
    %71 = vector.broadcast %cst_28 : f32 to vector<8x1xf32>
    %72 = arith.minimumf %70, %71 : vector<8x1xf32>
    %73 = math.absf %70 : vector<8x1xf32>
    %cst_29 = arith.constant 0.000000e+00 : f32
    %74 = vector.broadcast %cst_29 : f32 to vector<8x1xf32>
    %75 = arith.subf %74, %73 : vector<8x1xf32>
    %76 = math.exp %75 : vector<8x1xf32>
    %77 = math.log1p %76 : vector<8x1xf32>
    %78 = arith.subf %72, %77 : vector<8x1xf32>
    %79 = arith.addf %64, %78 : vector<8x1xf32>
    %c40 = arith.constant 40 : index
    %c0_30 = arith.constant 0 : index
    %80 = vector.load %arg9[%c40, %c0_30] : memref<48x128xf32, #tpu.memory_space<vmem>>, vector<8x128xf32>
    %81 = arith.mulf %80, %7 : vector<8x128xf32>
    %cst_31 = arith.constant dense<0.000000e+00> : vector<8xf32>
    %82 = vector.multi_reduction <add>, %81, %cst_31 [1] : vector<8x128xf32> to vector<8xf32>
    %83 = vector.shape_cast %82 : vector<8xf32> to vector<8x1xf32>
    %cst_32 = arith.constant 0.000000e+00 : f32
    %84 = vector.broadcast %cst_32 : f32 to vector<8x1xf32>
    %85 = arith.subf %84, %83 : vector<8x1xf32>
    %cst_33 = arith.constant 0.000000e+00 : f32
    %86 = vector.broadcast %cst_33 : f32 to vector<8x1xf32>
    %87 = arith.minimumf %85, %86 : vector<8x1xf32>
    %88 = math.absf %85 : vector<8x1xf32>
    %cst_34 = arith.constant 0.000000e+00 : f32
    %89 = vector.broadcast %cst_34 : f32 to vector<8x1xf32>
    %90 = arith.subf %89, %88 : vector<8x1xf32>
    %91 = math.exp %90 : vector<8x1xf32>
    %92 = math.log1p %91 : vector<8x1xf32>
    %93 = arith.subf %87, %92 : vector<8x1xf32>
    %94 = arith.addf %79, %93 : vector<8x1xf32>
    %c8_i32_35 = arith.constant 8 : i32
    %95 = arith.subi %c8_i32_35, %2 : i32
    %c0_i32_36 = arith.constant 0 : i32
    %c8_i32_37 = arith.constant 8 : i32
    %96 = arith.maxsi %c0_i32_36, %95 : i32
    %97 = arith.minsi %c8_i32_37, %96 : i32
    %98 = tpu.iota {dimensions = array<i32: 0>} : vector<8x1xi32>
    %99 = vector.broadcast %97 : i32 to vector<8x1xi32>
    %100 = arith.cmpi slt, %98, %99 : vector<8x1xi32>
    %cst_38 = arith.constant 0.000000e+00 : f32
    %101 = vector.broadcast %cst_38 : f32 to vector<8x1xf32>
    %102 = arith.select %100, %94, %101 : vector<8x1xi1>, vector<8x1xf32>
    %c0_39 = arith.constant 0 : index
    %c0_40 = arith.constant 0 : index
    %103 = vector.load %arg10[%c0_39, %c0_40] : memref<1x1xf32, #tpu.memory_space<vmem>>, vector<1x1xf32>
    %104 = vector.shape_cast %102 : vector<8x1xf32> to vector<1x8x1xf32>
    %cst_41 = arith.constant dense<0.000000e+00> : vector<1xf32>
    %105 = vector.multi_reduction <add>, %104, %cst_41 [1, 2] : vector<1x8x1xf32> to vector<1xf32>
    %106 = vector.shape_cast %105 : vector<1xf32> to vector<1x1x1xf32>
    %107 = vector.extract %106[0, 0, 0] : f32 from vector<1x1x1xf32>
    %108 = vector.broadcast %107 : f32 to vector<1x1xf32>
    %109 = arith.addf %103, %108 : vector<1x1xf32>
    %c0_42 = arith.constant 0 : index
    %c0_43 = arith.constant 0 : index
    %110 = vector.load %arg10[%c0_42, %c0_43] : memref<1x1xf32, #tpu.memory_space<vmem>>, vector<1x1xf32>
    tpu.vector_store %arg10[%c0_42, %c0_43], %109 {strides = array<i32>} : memref<1x1xf32, #tpu.memory_space<vmem>>, vector<1x1xf32>,
    %c0_i32_44 = arith.constant 0 : i32
    %111 = arith.cmpi eq, %arg1, %c0_i32_44 : i32
    %112 = arith.extui %111 : i1 to i32
    %c0_i32_45 = arith.constant 0 : i32
    %113 = arith.cmpi ne, %112, %c0_i32_45 : i32
    scf.if %113 {
      %c0_46 = arith.constant 0 : index
      %c0_47 = arith.constant 0 : index
      %114 = vector.load %arg10[%c0_46, %c0_47] : memref<1x1xf32, #tpu.memory_space<vmem>>, vector<1x1xf32>
      %cst_48 = arith.constant 0.000000e+00 : f32
      %115 = vector.broadcast %cst_48 : f32 to vector<1x1xf32>
      %116 = arith.subf %115, %114 : vector<1x1xf32>
      %117 = vector.shape_cast %116 : vector<1x1xf32> to vector<1x1x1xf32>
      %c0_49 = arith.constant 0 : index
      %c0_50 = arith.constant 0 : index
      %c0_51 = arith.constant 0 : index
      %118 = vector.load %arg7[%c0_49, %c0_50, %c0_51] : memref<1x1x1xf32, #tpu.memory_space<vmem>>, vector<1x1x1xf32>
      tpu.vector_store %arg7[%c0_49, %c0_50, %c0_51], %117 {strides = array<i32>} : memref<1x1x1xf32, #tpu.memory_space<vmem>>, vector<1x1x1xf32>,
    } else {
    }
    return
  }
  func.func @transform_0(%arg0: i32, %arg1: i32, %arg2: memref<8xi32, #tpu.memory_space<smem>>, %arg3: memref<8xi32, #tpu.memory_space<smem>>, %arg4: memref<40xi32, #tpu.memory_space<smem>>) -> (i32, i32) {
    %c0_i32 = arith.constant 0 : i32
    %c0_i32_0 = arith.constant 0 : i32
    %c0_i32_1 = arith.constant 0 : i32
    return %c0_i32, %c0_i32_0 : i32, i32
  }
  func.func @transform_1(%arg0: i32, %arg1: i32, %arg2: memref<8xi32, #tpu.memory_space<smem>>, %arg3: memref<8xi32, #tpu.memory_space<smem>>, %arg4: memref<40xi32, #tpu.memory_space<smem>>) -> (i32, i32) {
    %c0_i32 = arith.constant 0 : i32
    %c0_i32_0 = arith.constant 0 : i32
    %c0_i32_1 = arith.constant 0 : i32
    return %c0_i32, %c0_i32_0 : i32, i32
  }
  func.func @transform_2(%arg0: i32, %arg1: i32, %arg2: memref<8xi32, #tpu.memory_space<smem>>, %arg3: memref<8xi32, #tpu.memory_space<smem>>, %arg4: memref<40xi32, #tpu.memory_space<smem>>) -> (i32, i32, i32) {
    %c0_i32 = arith.constant 0 : i32
    %c0_i32_0 = arith.constant 0 : i32
    %c0_i32_1 = arith.constant 0 : i32
    return %arg0, %c0_i32, %c0_i32_0 : i32, i32, i32
  }
}

</mosaic_0001>

<llo_original>
// kernel: skipgram_neg_sampling_loss.3
$region0: #{skipgram_neg_sampling_loss.3}
  #allocation0 [shape = 'u32[]', space=smem, size = 0x4, offset = 0x4, fixed_abs, tag = 'smem constant byte address 0x4 - core index']
  #allocation1 [shape = 'u32[144,128]{1,0:T(1,128)}', space=vmem, size = 0x12000, scoped, tag = 'internal scratch']
  #allocation2 [shape = 'f32[8,128]{1,0:T(8,128)}', space=vmem, size = 0x1000, scoped, tag = 'scratch operand']
  #allocation3 [shape = 'f32[48,128]{1,0:T(8,128)}', space=vmem, size = 0x6000, scoped, tag = 'scratch operand']
  #allocation4 [shape = 'f32[1,1]{1,0:T(1,128)}', space=vmem, size = 0x200, scoped, tag = 'scratch operand']
  #allocation5 [shape = 's32[1]{0}', space=sflag, size = 0x4, scoped, tag = 'scoped memory for skipgram_neg_sampling_loss.3']
  #allocation6 [shape = 'u8[512]{0}', space=smem, size = 0x200, scoped, tag = 'prefetched SMEM operand 0']
  #allocation7 [shape = 'u8[512]{0}', space=smem, size = 0x200, scoped, tag = 'prefetched SMEM operand 1']
  #allocation8 [shape = 'u8[512]{0}', space=smem, size = 0x200, scoped, tag = 'prefetched SMEM operand 2']
  %s0 = inlined_call_operand.vmem [shape: s32[8], index: 0, kind: input, shape index: {}]
  %s1 = inlined_call_operand.vmem [shape: s32[8], index: 1, kind: input, shape index: {}]
  %s2 = inlined_call_operand.vmem [shape: s32[40], index: 2, kind: input, shape index: {}]
  %s3 = inlined_call_operand.vmem [shape: f32[64,128], index: 3, kind: input, shape index: {}]
  %s4 = inlined_call_operand.vmem [shape: f32[64,128], index: 4, kind: input, shape index: {}]
  %s5 = inlined_call_operand.hbm [shape: f32[1,1,1], index: 5, kind: output, shape index: {}]
  %s6 = sld [smem:[#allocation0]]
  $region33: #{skipgram_neg_sampling_loss.3} parent=0
    _
  %s8 = ssub.s32 1, %s6
  %s9 = scalar_select 0, %s8, %s6
  %s10 = sshll.u32 %s0, 4
  %s11 = int_to_ptr.vmem [resolvable:$true] %s10
  %13 = dma.vmem_to_smem %s11, 16, [#allocation6], [#allocation5]
  %s14 = sshll.u32 %s1, 4
  %s15 = int_to_ptr.vmem [resolvable:$true] %s14
  %17 = dma.vmem_to_smem %s15, 16, [#allocation7], [#allocation5]
  %s18 = sshll.u32 %s2, 4
  %s19 = int_to_ptr.vmem [resolvable:$true] %s18
  %21 = dma.vmem_to_smem %s19, 16, [#allocation8], [#allocation5]
  %22 = dma.done [#allocation5], 48
  %23 = sfence
  $region1: #{skipgram_neg_sampling_loss.3} parent=0
    #allocation9 [shape = 'u8[512]{0}', space=vmem, size = 0x400, scoped, tag = 'output window, operand 0, single buffered']
    #allocation10 [shape = 's32[1]{0}', space=sflag, size = 0x4, scoped, tag = 'scoped memory for skipgram_neg_sampling_loss.3']
    %24 = vsyncpa [#allocation10], 0
    // Predicated region
    $region2: #{skipgram_neg_sampling_loss.3} parent=1 // pred_check
      _
    $region3: #{skipgram_neg_sampling_loss.3} parent=1 // pred_check_branch
      %26 = sbr.rel (0) target = $region5
    $region4: #{skipgram_neg_sampling_loss.3} parent=1 // pred_region
      _
    $region5: #{skipgram_neg_sampling_loss.3} parent=1 // pred_fallthru
      _
    // Predicated region
    $region6: #{skipgram_neg_sampling_loss.3} parent=1 // pred_check
      _
    $region7: #{skipgram_neg_sampling_loss.3} parent=1 // pred_check_branch
      %28 = sbr.rel (0) target = $region9
    $region8: #{skipgram_neg_sampling_loss.3} parent=1 // pred_region
      _
    $region9: #{skipgram_neg_sampling_loss.3} parent=1 // pred_fallthru
      _
    %s29 = sadd.s32 0, 0
    %s30 = smul.u32 %s29, 8
    %p31 = scmp.eq.s32.totalorder 0, 0
    // Predicated region
    $region10: #{skipgram_neg_sampling_loss.3} parent=1 // pred_check
      %p32 = pneg %p31
    $region11: #{skipgram_neg_sampling_loss.3} parent=1 // pred_check_branch
      %34 = sbr.rel (%p32) target = $region13
    $region12: #{skipgram_neg_sampling_loss.3} parent=1 // pred_region
      %vm35 = vcmask 0
      %36 = vst.msk [vmem:[#allocation4] sm:$0x1] %vm35, 0.0
    $region13: #{skipgram_neg_sampling_loss.3} parent=1 // pred_fallthru
      _
    loop: start=0, step=1, limit=8
    $region14: #{skipgram_neg_sampling_loss.3} parent=1 // loop_pre_header
      _
    $region15: #{skipgram_neg_sampling_loss.3} parent=1 // loop_header
      %s38 = sphi 0, %s42
      %p39 = scmp.ge.s32.totalorder %s38, 8
    $region16: #{skipgram_neg_sampling_loss.3} parent=1 // loop_header_branch
      %41 = sbr.rel (%p39) target = $region20
    $region17: #{skipgram_neg_sampling_loss.3} parent=1 // loop_body
      %s43 = sadd.s32 %s30, %s38
      %s44 = sld [smem:[#allocation6 + %s43]]
      %s45 = sld [smem:[#allocation7 + %s43]]
      %s46 = scalar_lea.vmem %s3, %s44
      %v47 = vld [vmem:[%s46] sm:$0x1]
      %s48 = scalar_lea.vmem [#allocation2], %s38
      %49 = vst [vmem:[%s48] sm:$0x1] %v47
      %s50 = scalar_lea.vmem %s4, %s45
      %v51 = vld [vmem:[%s50] sm:$0x1]
      %s52 = scalar_lea.vmem [#allocation3], %s38
      %53 = vst [vmem:[%s52] sm:$0x1] %v51
      %s54 = smul.u32 %s43, 5
      %s55 = sld [smem:[#allocation8 + %s54]]
      %s56 = scalar_lea.vmem %s4, %s55
      %v57 = vld [vmem:[%s56] sm:$0x1]
      %s58 = sadd.s32 %s38, 8
      %s59 = scalar_lea.vmem [#allocation3], %s58
      %60 = vst [vmem:[%s59] sm:$0x1] %v57
      %s61 = sadd.s32 %s54, 1
      %s62 = sld [smem:[#allocation8 + %s61]]
      %s63 = scalar_lea.vmem %s4, %s62
      %v64 = vld [vmem:[%s63] sm:$0x1]
      %s65 = sadd.s32 %s38, 16
      %s66 = scalar_lea.vmem [#allocation3], %s65
      %67 = vst [vmem:[%s66] sm:$0x1] %v64
      %s68 = sadd.s32 %s54, 2
      %s69 = sld [smem:[#allocation8 + %s68]]
      %s70 = scalar_lea.vmem %s4, %s69
      %v71 = vld [vmem:[%s70] sm:$0x1]
      %s72 = sadd.s32 %s38, 24
      %s73 = scalar_lea.vmem [#allocation3], %s72
      %74 = vst [vmem:[%s73] sm:$0x1] %v71
      %s75 = sadd.s32 %s54, 3
      %s76 = sld [smem:[#allocation8 + %s75]]
      %s77 = scalar_lea.vmem %s4, %s76
      %v78 = vld [vmem:[%s77] sm:$0x1]
      %s79 = sadd.s32 %s38, 32
      %s80 = scalar_lea.vmem [#allocation3], %s79
      %81 = vst [vmem:[%s80] sm:$0x1] %v78
      %s82 = sadd.s32 %s54, 4
      %s83 = sld [smem:[#allocation8 + %s82]]
      %s84 = scalar_lea.vmem %s4, %s83
      %v85 = vld [vmem:[%s84] sm:$0x1]
      %s86 = sadd.s32 %s38, 40
      %s87 = scalar_lea.vmem [#allocation3], %s86
      %88 = vst [vmem:[%s87] sm:$0x1] %v85
    $region18: #{skipgram_neg_sampling_loss.3} parent=1 // loop_footer
      %s42 = sadd.s32 1, %s38
    $region19: #{skipgram_neg_sampling_loss.3} parent=1 // loop_footer_branch
      %37 = sbr.rel target = $region15
    $region20: #{skipgram_neg_sampling_loss.3} parent=1 // loop_exit
      _
    %v89 = vld [vmem:[#allocation2] sm:$0xff]
    %v90 = vld [vmem:[#allocation3] sm:$0xff]
    %v91 = vmul.f32 %v90, %v89
    %92 = vadd.xlane.f32.xlu0 %v91
    %v93 = vpop.xlane.xlu0 %92
    %v94 = vmin.f32 %v93, 0.0
    %v95 = vand.u32 2147483647, %v93
    %v96 = vsub.f32 0.0, %v95
    %v97 = vmul.f32 %v96, 1.442695
    %v98 = vpow.pop %v97
    %v99 = vadd.f32 %v98, 1.0
    %v100 = vlog2.pop %v99
    %v101 = vmul.f32 %v100, 0.6931472
    %v102 = vmul.f32 -0.5, %v98
    %v103 = vadd.f32 %v102, 1.0
    %v104 = vmul.f32 %v103, %v98
    %v105 = vand.u32 2147483647, %v98
    %vm106 = vcmp.lt.f32.partialorder %v105, 0.0004427343
    %v107 = vsel %vm106, %v104, %v101
    %v108 = vsub.f32 %v94, %v107
    %v109 = vld [vmem:[#allocation3 + $0x8] sm:$0xff]
    %v110 = vmul.f32 %v109, %v89
    %111 = vadd.xlane.f32.xlu0 %v110
    %v112 = vpop.xlane.xlu0 %111
    %v113 = vsub.f32 0.0, %v112
    %v114 = vmin.f32 %v113, 0.0
    %v115 = vand.u32 2147483647, %v113
    %v116 = vsub.f32 0.0, %v115
    %v117 = vmul.f32 %v116, 1.442695
    %v118 = vpow.pop %v117
    %v119 = vadd.f32 %v118, 1.0
    %v120 = vlog2.pop %v119
    %v121 = vmul.f32 %v120, 0.6931472
    %v122 = vmul.f32 -0.5, %v118
    %v123 = vadd.f32 %v122, 1.0
    %v124 = vmul.f32 %v123, %v118
    %v125 = vand.u32 2147483647, %v118
    %vm126 = vcmp.lt.f32.partialorder %v125, 0.0004427343
    %v127 = vsel %vm126, %v124, %v121
    %v128 = vsub.f32 %v114, %v127
    %v129 = vadd.f32 %v108, %v128
    %v130 = vld [vmem:[#allocation3 + $0x10] sm:$0xff]
    %v131 = vmul.f32 %v130, %v89
    %132 = vadd.xlane.f32.xlu0 %v131
    %v133 = vpop.xlane.xlu0 %132
    %v134 = vsub.f32 0.0, %v133
    %v135 = vmin.f32 %v134, 0.0
    %v136 = vand.u32 2147483647, %v134
    %v137 = vsub.f32 0.0, %v136
    %v138 = vmul.f32 %v137, 1.442695
    %v139 = vpow.pop %v138
    %v140 = vadd.f32 %v139, 1.0
    %v141 = vlog2.pop %v140
    %v142 = vmul.f32 %v141, 0.6931472
    %v143 = vmul.f32 -0.5, %v139
    %v144 = vadd.f32 %v143, 1.0
    %v145 = vmul.f32 %v144, %v139
    %v146 = vand.u32 2147483647, %v139
    %vm147 = vcmp.lt.f32.partialorder %v146, 0.0004427343
    %v148 = vsel %vm147, %v145, %v142
    %v149 = vsub.f32 %v135, %v148
    %v150 = vadd.f32 %v129, %v149
    %v151 = vld [vmem:[#allocation3 + $0x18] sm:$0xff]
    %v152 = vmul.f32 %v151, %v89
    %153 = vadd.xlane.f32.xlu0 %v152
    %v154 = vpop.xlane.xlu0 %153
    %v155 = vsub.f32 0.0, %v154
    %v156 = vmin.f32 %v155, 0.0
    %v157 = vand.u32 2147483647, %v155
    %v158 = vsub.f32 0.0, %v157
    %v159 = vmul.f32 %v158, 1.442695
    %v160 = vpow.pop %v159
    %v161 = vadd.f32 %v160, 1.0
    %v162 = vlog2.pop %v161
    %v163 = vmul.f32 %v162, 0.6931472
    %v164 = vmul.f32 -0.5, %v160
    %v165 = vadd.f32 %v164, 1.0
    %v166 = vmul.f32 %v165, %v160
    %v167 = vand.u32 2147483647, %v160
    %vm168 = vcmp.lt.f32.partialorder %v167, 0.0004427343
    %v169 = vsel %vm168, %v166, %v163
    %v170 = vsub.f32 %v156, %v169
    %v171 = vadd.f32 %v150, %v170
    %v172 = vld [vmem:[#allocation3 + $0x20] sm:$0xff]
    %v173 = vmul.f32 %v172, %v89
    %174 = vadd.xlane.f32.xlu0 %v173
    %v175 = vpop.xlane.xlu0 %174
    %v176 = vsub.f32 0.0, %v175
    %v177 = vmin.f32 %v176, 0.0
    %v178 = vand.u32 2147483647, %v176
    %v179 = vsub.f32 0.0, %v178
    %v180 = vmul.f32 %v179, 1.442695
    %v181 = vpow.pop %v180
    %v182 = vadd.f32 %v181, 1.0
    %v183 = vlog2.pop %v182
    %v184 = vmul.f32 %v183, 0.6931472
    %v185 = vmul.f32 -0.5, %v181
    %v186 = vadd.f32 %v185, 1.0
    %v187 = vmul.f32 %v186, %v181
    %v188 = vand.u32 2147483647, %v181
    %vm189 = vcmp.lt.f32.partialorder %v188, 0.0004427343
    %v190 = vsel %vm189, %v187, %v184
    %v191 = vsub.f32 %v177, %v190
    %v192 = vadd.f32 %v171, %v191
    %v193 = vld [vmem:[#allocation3 + $0x28] sm:$0xff]
    %v194 = vmul.f32 %v193, %v89
    %195 = vadd.xlane.f32.xlu0 %v194
    %v196 = vpop.xlane.xlu0 %195
    %v197 = vsub.f32 0.0, %v196
    %v198 = vmin.f32 %v197, 0.0
    %v199 = vand.u32 2147483647, %v197
    %v200 = vsub.f32 0.0, %v199
    %v201 = vmul.f32 %v200, 1.442695
    %v202 = vpow.pop %v201
    %v203 = vadd.f32 %v202, 1.0
    %v204 = vlog2.pop %v203
    %v205 = vmul.f32 %v204, 0.6931472
    %v206 = vmul.f32 -0.5, %v202
    %v207 = vadd.f32 %v206, 1.0
    %v208 = vmul.f32 %v207, %v202
    %v209 = vand.u32 2147483647, %v202
    %vm210 = vcmp.lt.f32.partialorder %v209, 0.0004427343
    %v211 = vsel %vm210, %v208, %v205
    %v212 = vsub.f32 %v198, %v211
    %v213 = vadd.f32 %v192, %v212
    %s214 = ssub.s32 8, %s30
    %p215 = scmp.gt.s32.totalorder %s214, 0
    %s216 = scalar_select %p215, %s214, 0
    %p217 = scmp.lt.s32.totalorder %s216, 8
    %s218 = scalar_select %p217, %s216, 8
    %v219 = vlaneseq
    %v220 = vshrl.u32 %v219, 7
    %v221 = vstv %s218
    %vm222 = vcmp.lt.s32.totalorder %v220, %v221
    %v223 = vsel %vm222, %v213, 0.0
    %v224 = vld [vmem:[#allocation4] sm:$0x1]
    %vm225 = vcmask 7168
    %v226 = vsel %vm225, %v223, 0.0
    %227 = vadd.xlane.f32.xlu0 %v226
    %v228 = vpop.xlane.xlu0 %227
    %v229 = vrot.slane %v228, 4
    %v230 = vadd.f32 %v228, %v229
    %v231 = vrot.slane %v230, 2
    %v232 = vadd.f32 %v230, %v231
    %v233 = vrot.slane %v232, 1
    %v234 = vadd.f32 %v232, %v233
    %s235 = vtos %v234
    %v236 = vstv %s235
    %v237 = vadd.f32 %v224, %v236
    %vm238 = vcmask 0
    %239 = vst.msk [vmem:[#allocation4] sm:$0x1] %vm238, %v237
    // Predicated region
    $region21: #{skipgram_neg_sampling_loss.3} parent=1 // pred_check
      %p240 = pneg %p31
    $region22: #{skipgram_neg_sampling_loss.3} parent=1 // pred_check_branch
      %242 = sbr.rel (%p240) target = $region24
    $region23: #{skipgram_neg_sampling_loss.3} parent=1 // pred_region
      %v243 = vld [vmem:[#allocation4] sm:$0x1]
      %v244 = vsub.f32 0.0, %v243
      %245 = vst.msk [vmem:[#allocation9] sm:$0x1] %vm238, %v244
    $region24: #{skipgram_neg_sampling_loss.3} parent=1 // pred_fallthru
      _
    // Predicated region
    $region25: #{skipgram_neg_sampling_loss.3} parent=1 // pred_check
      _
    $region26: #{skipgram_neg_sampling_loss.3} parent=1 // pred_check_branch
      %247 = sbr.rel (0) target = $region28
    $region27: #{skipgram_neg_sampling_loss.3} parent=1 // pred_region
      %s249 = ssub.s32 16, 16
      %250 = vsyncadd [#allocation10], %s249
      %s252 = sshll.u32 [#allocation9], 4
      %s253 = int_to_ptr.vmem [resolvable:$true] %s252
      %255 = dma.vmem_to_hbm [thread:$0]  %s253, 16, %s5, [#allocation10]
    $region28: #{skipgram_neg_sampling_loss.3} parent=1 // pred_fallthru
      _
    // Predicated region
    $region29: #{skipgram_neg_sampling_loss.3} parent=1 // pred_check
      _
    $region30: #{skipgram_neg_sampling_loss.3} parent=1 // pred_check_branch
      %257 = sbr.rel (0) target = $region32
    $region31: #{skipgram_neg_sampling_loss.3} parent=1 // pred_region
      %258 = dma.done [#allocation10], 16
    $region32: #{skipgram_neg_sampling_loss.3} parent=1 // pred_fallthru
      _
    %259 = vsyncpa [#allocation10], 1

// kernel: skipgram_neg_sampling_loss.2
$region0: #{skipgram_neg_sampling_loss.2}
  #allocation0 [shape = 'u32[]', space=smem, size = 0x4, offset = 0x4, fixed_abs, tag = 'smem constant byte address 0x4 - core index']
  #allocation1 [shape = 'u32[144,128]{1,0:T(1,128)}', space=vmem, size = 0x12000, scoped, tag = 'internal scratch']
  #allocation2 [shape = 'f32[8,128]{1,0:T(8,128)}', space=vmem, size = 0x1000, scoped, tag = 'scratch operand']
  #allocation3 [shape = 'f32[48,128]{1,0:T(8,128)}', space=vmem, size = 0x6000, scoped, tag = 'scratch operand']
  #allocation4 [shape = 'f32[1,1]{1,0:T(1,128)}', space=vmem, size = 0x200, scoped, tag = 'scratch operand']
  #allocation5 [shape = 's32[1]{0}', space=sflag, size = 0x4, scoped, tag = 'scoped memory for skipgram_neg_sampling_loss.2']
  #allocation6 [shape = 'u8[512]{0}', space=smem, size = 0x200, scoped, tag = 'prefetched SMEM operand 0']
  #allocation7 [shape = 'u8[512]{0}', space=smem, size = 0x200, scoped, tag = 'prefetched SMEM operand 1']
  #allocation8 [shape = 'u8[512]{0}', space=smem, size = 0x200, scoped, tag = 'prefetched SMEM operand 2']
  %s0 = inlined_call_operand.vmem [shape: s32[16], index: 0, kind: input, shape index: {}]
  %s1 = inlined_call_operand.vmem [shape: s32[16], index: 1, kind: input, shape index: {}]
  %s2 = inlined_call_operand.vmem [shape: s32[80], index: 2, kind: input, shape index: {}]
  %s3 = inlined_call_operand.hbm [shape: f32[64,128], index: 3, kind: input, shape index: {}]
  %s4 = inlined_call_operand.vmem [shape: f32[64,128], index: 4, kind: input, shape index: {}]
  %s5 = inlined_call_operand.vmem [shape: f32[2,1,1], index: 5, kind: output, shape index: {}]
  %s6 = sld [smem:[#allocation0]]
  $region60: #{skipgram_neg_sampling_loss.2} parent=0
    _
  %s8 = ssub.s32 1, %s6
  %s9 = scalar_select 0, %s8, %s6
  %s10 = sshll.u32 %s0, 4
  %s11 = int_to_ptr.vmem [resolvable:$true] %s10
  %13 = dma.vmem_to_smem %s11, 16, [#allocation6], [#allocation5]
  %s14 = sshll.u32 %s1, 4
  %s15 = int_to_ptr.vmem [resolvable:$true] %s14
  %17 = dma.vmem_to_smem %s15, 16, [#allocation7], [#allocation5]
  %s18 = sshll.u32 %s2, 4
  %s19 = int_to_ptr.vmem [resolvable:$true] %s18
  %21 = dma.vmem_to_smem %s19, 16, [#allocation8], [#allocation5]
  %22 = dma.done [#allocation5], 48
  %23 = sfence
  $region1: #{skipgram_neg_sampling_loss.2} parent=0
    #allocation9 [shape = 'u8[32768]{0}', space=vmem, size = 0x8000, scoped, tag = 'input window, operand 3, single buffered']
    #allocation10 [shape = 's32[2]{0}', space=sflag, size = 0x8, scoped, tag = 'scoped memory for skipgram_neg_sampling_loss.2']
    %24 = vsyncpa [#allocation10], 0
    loop: start=0, step=1, limit=4
    $region2: #{skipgram_neg_sampling_loss.2} parent=1 // loop_pre_header
      _
    $region3: #{skipgram_neg_sampling_loss.2} parent=1 // loop_header
      %s26 = sphi 0, %s30
      %p27 = scmp.ge.s32.totalorder %s26, 4
      %s33 = sphi 0, %s45
      %s34 = sphi 0, %s41
      %s35 = sphi 0, %s33
      %s36 = sphi 0, %s34
      %s37 = sphi 0, %s35
      %s38 = sphi 0, %s36
      %s46 = sphi 0, %s46
      %s48 = sphi 0, %s46
      %s49 = sphi 0, %s48
      %s63 = sphi 0, %s49
      %s67 = sphi 0, %s67
      %s69 = sphi 0, %s67
      %s70 = sphi 0, %s69
      %s84 = sphi 0, %s70
      %s90 = sphi 0, %s92
      %s93 = sphi 0, %s90
      %s94 = sphi 0, %s93
      %s110 = sphi 0, %s94
    $region4: #{skipgram_neg_sampling_loss.2} parent=1 // loop_header_branch
      %29 = sbr.rel (%p27) target = $region8
    $region5: #{skipgram_neg_sampling_loss.2} parent=1 // loop_body
      %s31 = ssub.s32 %s26, 1
      %s32 = ssub.s32 %s26, 2
      %s39 = sadd.s32 1, %s34
      %p40 = scmp.ge.s32.totalorder %s39, 1
      %s41 = scalar_select %p40, 0, %s39
      %s42 = sadd.s32 1, %s33
      %s43 = scalar_select %p40, %s42, %s33
      %p44 = scmp.ge.s32.totalorder %s43, 2
      %s45 = scalar_select %p44, 0, %s43
      %s47 = sadd.s32 %s46, 1
      %p50 = scmp.eq.s32.totalorder %s26, 1
      %p51 = scmp.ne.s32.totalorder %s46, %s48
      %p52 = scmp.eq.s32.totalorder %s26, 0
      %p53 = por %p51, %p52
      %p54 = scmp.ne.s32.totalorder %s46, %s48
      %p55 = scmp.eq.s32.totalorder %s31, 1
      %p56 = por %p54, %p55
      %p57 = scmp.ne.s32.totalorder %s48, %s49
      %p58 = scmp.eq.s32.totalorder %s31, 0
      %p59 = por %p57, %p58
      %p60 = scmp.ne.s32.totalorder %s48, %s49
      %p61 = scmp.eq.s32.totalorder %s32, 1
      %p62 = por %p60, %p61
      %p64 = scmp.ne.s32.totalorder %s49, %s63
      %p65 = scmp.eq.s32.totalorder %s32, 0
      %p66 = por %p64, %p65
      %s68 = sadd.s32 %s67, 1
      %p71 = scmp.eq.s32.totalorder %s26, 1
      %p72 = scmp.ne.s32.totalorder %s67, %s69
      %p73 = scmp.eq.s32.totalorder %s26, 0
      %p74 = por %p72, %p73
      %p75 = scmp.ne.s32.totalorder %s67, %s69
      %p76 = scmp.eq.s32.totalorder %s31, 1
      %p77 = por %p75, %p76
      %p78 = scmp.ne.s32.totalorder %s69, %s70
      %p79 = scmp.eq.s32.totalorder %s31, 0
      %p80 = por %p78, %p79
      %p81 = scmp.ne.s32.totalorder %s69, %s70
      %p82 = scmp.eq.s32.totalorder %s32, 1
      %p83 = por %p81, %p82
      %p85 = scmp.ne.s32.totalorder %s70, %s84
      %p86 = scmp.eq.s32.totalorder %s32, 0
      %p87 = por %p85, %p86
      %s88 = ssub.s32 %s33, %s45
      %p89 = scmp.eq.s32.totalorder %s88, 0
      %s91 = sadd.s32 %s90, 1
      %s92 = scalar_select %p89, %s90, %s91
      %p95 = pneg %p89
      %p96 = scmp.eq.s32.totalorder %s26, 1
      %p97 = por %p95, %p96
      %p98 = scmp.ne.s32.totalorder %s90, %s93
      %p99 = scmp.eq.s32.totalorder %s26, 0
      %p100 = por %p98, %p99
      %p101 = scmp.ne.s32.totalorder %s90, %s93
      %p102 = scmp.eq.s32.totalorder %s31, 1
      %p103 = por %p101, %p102
      %p104 = scmp.ne.s32.totalorder %s93, %s94
      %p105 = scmp.eq.s32.totalorder %s31, 0
      %p106 = por %p104, %p105
      %p107 = scmp.ne.s32.totalorder %s93, %s94
      %p108 = scmp.eq.s32.totalorder %s32, 1
      %p109 = por %p107, %p108
      %p111 = scmp.ne.s32.totalorder %s94, %s110
      %p112 = scmp.eq.s32.totalorder %s32, 0
      %p113 = por %p111, %p112
      %p114 = scmp.le.s32.totalorder 1, %s26
      %p115 = scmp.lt.s32.totalorder %s26, 3
      %p116 = pnand %p114, %p115
      %p117 = pneg %p116
      // Predicated region
      $region9: #{skipgram_neg_sampling_loss.2} parent=5 // pred_check
        _
      $region10: #{skipgram_neg_sampling_loss.2} parent=5 // pred_check_branch
        %119 = sbr.rel (%p116) target = $region12
      $region11: #{skipgram_neg_sampling_loss.2} parent=5 // pred_region
        %s120 = ssub.s32 %s26, 1
        // Predicated region
        $region13: #{skipgram_neg_sampling_loss.2} parent=11 // pred_check
          %p121 = pneg %p59
        $region14: #{skipgram_neg_sampling_loss.2} parent=11 // pred_check_branch
          %123 = sbr.rel (%p121) target = $region16
        $region15: #{skipgram_neg_sampling_loss.2} parent=11 // pred_region
          %s125 = ssub.s32 1024, 1024
          %126 = vsyncadd [#allocation10], %s125
          %s127 = sshll.u32 [#allocation9], 4
          %s128 = int_to_ptr.vmem [resolvable:$true] %s127
          %133 = dma.hbm_to_vmem [thread:$0]  %s3, 1024, %s128, [#allocation10], 128, 128, 8
        $region16: #{skipgram_neg_sampling_loss.2} parent=11 // pred_fallthru
          _
        // Predicated region
        $region17: #{skipgram_neg_sampling_loss.2} parent=11 // pred_check
          %p134 = pneg %p80
        $region18: #{skipgram_neg_sampling_loss.2} parent=11 // pred_check_branch
          %136 = sbr.rel (%p134) target = $region20
        $region19: #{skipgram_neg_sampling_loss.2} parent=11 // pred_region
          _
        $region20: #{skipgram_neg_sampling_loss.2} parent=11 // pred_fallthru
          _
      $region12: #{skipgram_neg_sampling_loss.2} parent=5 // pred_fallthru
        _
      %p137 = scmp.lt.s32.totalorder %s26, 2
      // Predicated region
      $region21: #{skipgram_neg_sampling_loss.2} parent=5 // pred_check
        %p138 = pneg %p137
      $region22: #{skipgram_neg_sampling_loss.2} parent=5 // pred_check_branch
        %140 = sbr.rel (%p138) target = $region24
      $region23: #{skipgram_neg_sampling_loss.2} parent=5 // pred_region
        _
      $region24: #{skipgram_neg_sampling_loss.2} parent=5 // pred_fallthru
        _
      %p141 = scmp.le.s32.totalorder 1, %s26
      %p142 = scmp.lt.s32.totalorder %s26, 3
      %p143 = pnand %p141, %p142
      %p144 = pneg %p143
      // Predicated region
      $region25: #{skipgram_neg_sampling_loss.2} parent=5 // pred_check
        _
      $region26: #{skipgram_neg_sampling_loss.2} parent=5 // pred_check_branch
        %146 = sbr.rel (%p143) target = $region28
      $region27: #{skipgram_neg_sampling_loss.2} parent=5 // pred_region
        %s147 = ssub.s32 %s26, 1
        // Predicated region
        $region29: #{skipgram_neg_sampling_loss.2} parent=27 // pred_check
          %p148 = pneg %p59
        $region30: #{skipgram_neg_sampling_loss.2} parent=27 // pred_check_branch
          %150 = sbr.rel (%p148) target = $region32
        $region31: #{skipgram_neg_sampling_loss.2} parent=27 // pred_region
          %151 = dma.done [#allocation10], 1024
        $region32: #{skipgram_neg_sampling_loss.2} parent=27 // pred_fallthru
          _
        %p152 = pneg %p59
        %p153 = pneg %p56
        %p154 = pneg %p80
        %p155 = pneg %p77
        %p156 = pneg %p106
        %p157 = pneg %p103
        %p158 = scmp.lt.s32.totalorder %s35, 1
        %s159 = scalar_select %p158, %s35, 1
        %s160 = scalar_lea.vmem %s5, %s159
        %p161 = scmp.lt.s32.totalorder %s35, 1
        %s162 = scalar_select %p161, %s35, 1
        %s163 = scalar_lea.vmem %s5, %s162
        %s164 = sadd.s32 %s35, %s36
        %s165 = smul.u32 %s164, 8
        %p166 = scmp.eq.s32.totalorder %s36, 0
        // Predicated region
        $region33: #{skipgram_neg_sampling_loss.2} parent=27 // pred_check
          %p167 = pneg %p166
        $region34: #{skipgram_neg_sampling_loss.2} parent=27 // pred_check_branch
          %169 = sbr.rel (%p167) target = $region36
        $region35: #{skipgram_neg_sampling_loss.2} parent=27 // pred_region
          %vm170 = vcmask 0
          %171 = vst.msk [vmem:[#allocation4] sm:$0x1] %vm170, 0.0
        $region36: #{skipgram_neg_sampling_loss.2} parent=27 // pred_fallthru
          _
        loop: start=0, step=1, limit=8
        $region37: #{skipgram_neg_sampling_loss.2} parent=27 // loop_pre_header
          _
        $region38: #{skipgram_neg_sampling_loss.2} parent=27 // loop_header
          %s173 = sphi 0, %s177
          %p174 = scmp.ge.s32.totalorder %s173, 8
        $region39: #{skipgram_neg_sampling_loss.2} parent=27 // loop_header_branch
          %176 = sbr.rel (%p174) target = $region43
        $region40: #{skipgram_neg_sampling_loss.2} parent=27 // loop_body
          %s178 = sadd.s32 %s165, %s173
          %s179 = sld [smem:[#allocation6 + %s178]]
          %s180 = sld [smem:[#allocation7 + %s178]]
          %s181 = scalar_lea.vmem [#allocation9], %s179
          %v182 = vld [vmem:[%s181] sm:$0x1]
          %s183 = scalar_lea.vmem [#allocation2], %s173
          %184 = vst [vmem:[%s183] sm:$0x1] %v182
          %s185 = scalar_lea.vmem %s4, %s180
          %v186 = vld [vmem:[%s185] sm:$0x1]
          %s187 = scalar_lea.vmem [#allocation3], %s173
          %188 = vst [vmem:[%s187] sm:$0x1] %v186
          %s189 = smul.u32 %s178, 5
          %s190 = sld [smem:[#allocation8 + %s189]]
          %s191 = scalar_lea.vmem %s4, %s190
          %v192 = vld [vmem:[%s191] sm:$0x1]
          %s193 = sadd.s32 %s173, 8
          %s194 = scalar_lea.vmem [#allocation3], %s193
          %195 = vst [vmem:[%s194] sm:$0x1] %v192
          %s196 = sadd.s32 %s189, 1
          %s197 = sld [smem:[#allocation8 + %s196]]
          %s198 = scalar_lea.vmem %s4, %s197
          %v199 = vld [vmem:[%s198] sm:$0x1]
          %s200 = sadd.s32 %s173, 16
          %s201 = scalar_lea.vmem [#allocation3], %s200
          %202 = vst [vmem:[%s201] sm:$0x1] %v199
          %s203 = sadd.s32 %s189, 2
          %s204 = sld [smem:[#allocation8 + %s203]]
          %s205 = scalar_lea.vmem %s4, %s204
          %v206 = vld [vmem:[%s205] sm:$0x1]
          %s207 = sadd.s32 %s173, 24
          %s208 = scalar_lea.vmem [#allocation3], %s207
          %209 = vst [vmem:[%s208] sm:$0x1] %v206
          %s210 = sadd.s32 %s189, 3
          %s211 = sld [smem:[#allocation8 + %s210]]
          %s212 = scalar_lea.vmem %s4, %s211
          %v213 = vld [vmem:[%s212] sm:$0x1]
          %s214 = sadd.s32 %s173, 32
          %s215 = scalar_lea.vmem [#allocation3], %s214
          %216 = vst [vmem:[%s215] sm:$0x1] %v213
          %s217 = sadd.s32 %s189, 4
          %s218 = sld [smem:[#allocation8 + %s217]]
          %s219 = scalar_lea.vmem %s4, %s218
          %v220 = vld [vmem:[%s219] sm:$0x1]
          %s221 = sadd.s32 %s173, 40
          %s222 = scalar_lea.vmem [#allocation3], %s221
          %223 = vst [vmem:[%s222] sm:$0x1] %v220
        $region41: #{skipgram_neg_sampling_loss.2} parent=27 // loop_footer
          %s177 = sadd.s32 1, %s173
        $region42: #{skipgram_neg_sampling_loss.2} parent=27 // loop_footer_branch
          %172 = sbr.rel target = $region38
        $region43: #{skipgram_neg_sampling_loss.2} parent=27 // loop_exit
          _
        %v224 = vld [vmem:[#allocation2] sm:$0xff]
        %v225 = vld [vmem:[#allocation3] sm:$0xff]
        %v226 = vmul.f32 %v225, %v224
        %227 = vadd.xlane.f32.xlu0 %v226
        %v228 = vpop.xlane.xlu0 %227
        %v229 = vmin.f32 %v228, 0.0
        %v230 = vand.u32 2147483647, %v228
        %v231 = vsub.f32 0.0, %v230
        %v232 = vmul.f32 %v231, 1.442695
        %v233 = vpow.pop %v232
        %v234 = vadd.f32 %v233, 1.0
        %v235 = vlog2.pop %v234
        %v236 = vmul.f32 %v235, 0.6931472
        %v237 = vmul.f32 -0.5, %v233
        %v238 = vadd.f32 %v237, 1.0
        %v239 = vmul.f32 %v238, %v233
        %v240 = vand.u32 2147483647, %v233
        %vm241 = vcmp.lt.f32.partialorder %v240, 0.0004427343
        %v242 = vsel %vm241, %v239, %v236
        %v243 = vsub.f32 %v229, %v242
        %v244 = vld [vmem:[#allocation3 + $0x8] sm:$0xff]
        %v245 = vmul.f32 %v244, %v224
        %246 = vadd.xlane.f32.xlu0 %v245
        %v247 = vpop.xlane.xlu0 %246
        %v248 = vsub.f32 0.0, %v247
        %v249 = vmin.f32 %v248, 0.0
        %v250 = vand.u32 2147483647, %v248
        %v251 = vsub.f32 0.0, %v250
        %v252 = vmul.f32 %v251, 1.442695
        %v253 = vpow.pop %v252
        %v254 = vadd.f32 %v253, 1.0
        %v255 = vlog2.pop %v254
        %v256 = vmul.f32 %v255, 0.6931472
        %v257 = vmul.f32 -0.5, %v253
        %v258 = vadd.f32 %v257, 1.0
        %v259 = vmul.f32 %v258, %v253
        %v260 = vand.u32 2147483647, %v253
        %vm261 = vcmp.lt.f32.partialorder %v260, 0.0004427343
        %v262 = vsel %vm261, %v259, %v256
        %v263 = vsub.f32 %v249, %v262
        %v264 = vadd.f32 %v243, %v263
        %v265 = vld [vmem:[#allocation3 + $0x10] sm:$0xff]
        %v266 = vmul.f32 %v265, %v224
        %267 = vadd.xlane.f32.xlu0 %v266
        %v268 = vpop.xlane.xlu0 %267
        %v269 = vsub.f32 0.0, %v268
        %v270 = vmin.f32 %v269, 0.0
        %v271 = vand.u32 2147483647, %v269
        %v272 = vsub.f32 0.0, %v271
        %v273 = vmul.f32 %v272, 1.442695
        %v274 = vpow.pop %v273
        %v275 = vadd.f32 %v274, 1.0
        %v276 = vlog2.pop %v275
        %v277 = vmul.f32 %v276, 0.6931472
        %v278 = vmul.f32 -0.5, %v274
        %v279 = vadd.f32 %v278, 1.0
        %v280 = vmul.f32 %v279, %v274
        %v281 = vand.u32 2147483647, %v274
        %vm282 = vcmp.lt.f32.partialorder %v281, 0.0004427343
        %v283 = vsel %vm282, %v280, %v277
        %v284 = vsub.f32 %v270, %v283
        %v285 = vadd.f32 %v264, %v284
        %v286 = vld [vmem:[#allocation3 + $0x18] sm:$0xff]
        %v287 = vmul.f32 %v286, %v224
        %288 = vadd.xlane.f32.xlu0 %v287
        %v289 = vpop.xlane.xlu0 %288
        %v290 = vsub.f32 0.0, %v289
        %v291 = vmin.f32 %v290, 0.0
        %v292 = vand.u32 2147483647, %v290
        %v293 = vsub.f32 0.0, %v292
        %v294 = vmul.f32 %v293, 1.442695
        %v295 = vpow.pop %v294
        %v296 = vadd.f32 %v295, 1.0
        %v297 = vlog2.pop %v296
        %v298 = vmul.f32 %v297, 0.6931472
        %v299 = vmul.f32 -0.5, %v295
        %v300 = vadd.f32 %v299, 1.0
        %v301 = vmul.f32 %v300, %v295
        %v302 = vand.u32 2147483647, %v295
        %vm303 = vcmp.lt.f32.partialorder %v302, 0.0004427343
        %v304 = vsel %vm303, %v301, %v298
        %v305 = vsub.f32 %v291, %v304
        %v306 = vadd.f32 %v285, %v305
        %v307 = vld [vmem:[#allocation3 + $0x20] sm:$0xff]
        %v308 = vmul.f32 %v307, %v224
        %309 = vadd.xlane.f32.xlu0 %v308
        %v310 = vpop.xlane.xlu0 %309
        %v311 = vsub.f32 0.0, %v310
        %v312 = vmin.f32 %v311, 0.0
        %v313 = vand.u32 2147483647, %v311
        %v314 = vsub.f32 0.0, %v313
        %v315 = vmul.f32 %v314, 1.442695
        %v316 = vpow.pop %v315
        %v317 = vadd.f32 %v316, 1.0
        %v318 = vlog2.pop %v317
        %v319 = vmul.f32 %v318, 0.6931472
        %v320 = vmul.f32 -0.5, %v316
        %v321 = vadd.f32 %v320, 1.0
        %v322 = vmul.f32 %v321, %v316
        %v323 = vand.u32 2147483647, %v316
        %vm324 = vcmp.lt.f32.partialorder %v323, 0.0004427343
        %v325 = vsel %vm324, %v322, %v319
        %v326 = vsub.f32 %v312, %v325
        %v327 = vadd.f32 %v306, %v326
        %v328 = vld [vmem:[#allocation3 + $0x28] sm:$0xff]
        %v329 = vmul.f32 %v328, %v224
        %330 = vadd.xlane.f32.xlu0 %v329
        %v331 = vpop.xlane.xlu0 %330
        %v332 = vsub.f32 0.0, %v331
        %v333 = vmin.f32 %v332, 0.0
        %v334 = vand.u32 2147483647, %v332
        %v335 = vsub.f32 0.0, %v334
        %v336 = vmul.f32 %v335, 1.442695
        %v337 = vpow.pop %v336
        %v338 = vadd.f32 %v337, 1.0
        %v339 = vlog2.pop %v338
        %v340 = vmul.f32 %v339, 0.6931472
        %v341 = vmul.f32 -0.5, %v337
        %v342 = vadd.f32 %v341, 1.0
        %v343 = vmul.f32 %v342, %v337
        %v344 = vand.u32 2147483647, %v337
        %vm345 = vcmp.lt.f32.partialorder %v344, 0.0004427343
        %v346 = vsel %vm345, %v343, %v340
        %v347 = vsub.f32 %v333, %v346
        %v348 = vadd.f32 %v327, %v347
        %s349 = ssub.s32 12, %s165
        %p350 = scmp.gt.s32.totalorder %s349, 0
        %s351 = scalar_select %p350, %s349, 0
        %p352 = scmp.lt.s32.totalorder %s351, 8
        %s353 = scalar_select %p352, %s351, 8
        %v354 = vlaneseq
        %v355 = vshrl.u32 %v354, 7
        %v356 = vstv %s353
        %vm357 = vcmp.lt.s32.totalorder %v355, %v356
        %v358 = vsel %vm357, %v348, 0.0
        %v359 = vld [vmem:[#allocation4] sm:$0x1]
        %vm360 = vcmask 7168
        %v361 = vsel %vm360, %v358, 0.0
        %362 = vadd.xlane.f32.xlu0 %v361
        %v363 = vpop.xlane.xlu0 %362
        %v364 = vrot.slane %v363, 4
        %v365 = vadd.f32 %v363, %v364
        %v366 = vrot.slane %v365, 2
        %v367 = vadd.f32 %v365, %v366
        %v368 = vrot.slane %v367, 1
        %v369 = vadd.f32 %v367, %v368
        %s370 = vtos %v369
        %v371 = vstv %s370
        %v372 = vadd.f32 %v359, %v371
        %vm373 = vcmask 0
        %374 = vst.msk [vmem:[#allocation4] sm:$0x1] %vm373, %v372
        // Predicated region
        $region44: #{skipgram_neg_sampling_loss.2} parent=27 // pred_check
          %p375 = pneg %p166
        $region45: #{skipgram_neg_sampling_loss.2} parent=27 // pred_check_branch
          %377 = sbr.rel (%p375) target = $region47
        $region46: #{skipgram_neg_sampling_loss.2} parent=27 // pred_region
          %v378 = vld [vmem:[#allocation4] sm:$0x1]
          %v379 = vsub.f32 0.0, %v378
          %380 = vst.msk [vmem:[%s163] sm:$0x1] %vm373, %v379
        $region47: #{skipgram_neg_sampling_loss.2} parent=27 // pred_fallthru
          _
        %p381 = scmp.lt.s32.totalorder %s35, 1
        %s382 = scalar_select %p381, %s35, 1
        %s383 = scalar_lea.vmem %s5, %s382
        // Predicated region
        $region48: #{skipgram_neg_sampling_loss.2} parent=27 // pred_check
          %p384 = pneg %p103
        $region49: #{skipgram_neg_sampling_loss.2} parent=27 // pred_check_branch
          %386 = sbr.rel (%p384) target = $region51
        $region50: #{skipgram_neg_sampling_loss.2} parent=27 // pred_region
          _
        $region51: #{skipgram_neg_sampling_loss.2} parent=27 // pred_fallthru
          _
      $region28: #{skipgram_neg_sampling_loss.2} parent=5 // pred_fallthru
        _
      %p387 = scmp.le.s32.totalorder 2, %s26
      // Predicated region
      $region52: #{skipgram_neg_sampling_loss.2} parent=5 // pred_check
        %p388 = pneg %p387
      $region53: #{skipgram_neg_sampling_loss.2} parent=5 // pred_check_branch
        %390 = sbr.rel (%p388) target = $region55
      $region54: #{skipgram_neg_sampling_loss.2} parent=5 // pred_region
        %s391 = ssub.s32 %s26, 2
        // Predicated region
        $region56: #{skipgram_neg_sampling_loss.2} parent=54 // pred_check
          %p392 = pneg %p109
        $region57: #{skipgram_neg_sampling_loss.2} parent=54 // pred_check_branch
          %394 = sbr.rel (%p392) target = $region59
        $region58: #{skipgram_neg_sampling_loss.2} parent=54 // pred_region
          %p395 = scmp.lt.s32.totalorder %s37, 1
          %s396 = scalar_select %p395, %s37, 1
          %s397 = scalar_lea.vmem %s5, %s396
        $region59: #{skipgram_neg_sampling_loss.2} parent=54 // pred_fallthru
          _
      $region55: #{skipgram_neg_sampling_loss.2} parent=5 // pred_fallthru
        _
    $region6: #{skipgram_neg_sampling_loss.2} parent=1 // loop_footer
      %s30 = sadd.s32 1, %s26
    $region7: #{skipgram_neg_sampling_loss.2} parent=1 // loop_footer_branch
      %25 = sbr.rel target = $region3
    $region8: #{skipgram_neg_sampling_loss.2} parent=1 // loop_exit
      _
    %398 = vsyncpa [#allocation10], 1
    %s399 = scalar_lea.sflag [#allocation10], 1
    %400 = vsyncpa %s399, 1

</llo_original>
